<compile_context>
chip_gen: v6e
topology: v6e:2x2x1
jax: 0.10.0
libtpu: 0.0.40
codegen_flags: <defaults>
</compile_context>

<pallas_src>
import jax
import jax.numpy as jnp
from jax.experimental import pallas as pl
from jax.experimental.pallas import tpu as pltpu

_LANE = 128


# ----------------------------- Pallas kernel --------------------------------
def _fused_kernel(patches_ref, wc_ref, bc_ref,
                  w1_ref, b1_ref, w2_ref, b2_ref, out_ref):
    """Both branches share this body; grid axis 0 selects the branch (via the
    BlockSpec index_maps), grid axis 1 walks batch tiles."""
    tb, ohw, k = patches_ref.shape
    fp = wc_ref.shape[-1]

    # Conv as one well-shaped 2-D MXU matmul: (TB*OHW, K) x (K, Fp), bf16 in,
    # f32 accumulation. K stays at its real width (36); Mosaic pads lanes.
    patches = patches_ref[...].reshape(tb * ohw, k)                   # bf16
    conv = jnp.dot(patches, wc_ref[...],
                   preferred_element_type=jnp.float32)                # (TB*OHW, Fp) f32
    conv = jnp.maximum(conv + bc_ref[...], 0.0)                       # bias + ReLU (VPU)
    conv = conv.astype(jnp.bfloat16)                                  # halve the big temp

    # Global average pool as a VPU/sublane reduction (no MXU, no pool matrix).
    conv = conv.reshape(tb, ohw, fp)
    feat = jnp.sum(conv, axis=1, dtype=jnp.float32) * (1.0 / ohw)     # (TB, Fp) f32 acc
    feat = feat.astype(jnp.bfloat16)

    # Projection head: Linear -> ReLU -> Linear (bf16 MXU operands, f32 acc).
    h = jnp.dot(feat, w1_ref[...], preferred_element_type=jnp.float32)
    h = jnp.maximum(h + b1_ref[...], 0.0).astype(jnp.bfloat16)        # (TB, Hp)
    o = jnp.dot(h, w2_ref[...], preferred_element_type=jnp.float32)
    out_ref[...] = (o + b2_ref[...]).astype(out_ref.dtype)            # (TB, Pp) lane-dense bf16


# ------------------------------- JAX glue ------------------------------------
def _round_up(n, m):
    return ((n + m - 1) // m) * m


def _pad_axis(x, axis, target):
    pad = target - x.shape[axis]
    if pad <= 0:
        return x
    widths = [(0, 0)] * x.ndim
    widths[axis] = (0, pad)
    return jnp.pad(x, widths)


def _pick_batch_tile(bp, cap=64):
    """Largest multiple-of-16 tile <= cap that divides the (padded) batch.

    bp is already padded to a multiple of 16, so a valid tile always exists.
    The cap keeps the per-step VMEM working set small enough for v5e's 16 MiB
    and v7x's 32 MiB default scoped limits with double-buffering intact.
    """
    tb = min(bp, cap)
    tb -= tb % 16
    while tb > 16 and bp % tb:
        tb -= 16
    return max(tb, 16)


def _im2col(x, ksize=3, stride=2, pad=1):
    """x: (B, C, H, W) NCHW -> patches (B, OH*OW, C*ksize*ksize), f32.

    Patch flattening order matches the PyTorch Conv2d weight layout (F, C, kh, kw).
    """
    # TODO(synk): fold im2col into the kernel (DMA the raw image tile and build
    # the 9 shifted views in VMEM) to drop the remaining wrapper-side pass; at
    # stride 2 + bf16 patches the extra HBM traffic is only ~1.1x of the raw
    # input, so it is kept host-side here for lowering robustness.
    B, C, H, W = x.shape
    xp = jnp.pad(x, ((0, 0), (0, 0), (pad, pad), (pad, pad)))
    OH = (H + 2 * pad - ksize) // stride + 1
    OW = (W + 2 * pad - ksize) // stride + 1
    cols = []
    for i in range(ksize):
        for j in range(ksize):
            cols.append(xp[:, :, i:i + stride * OH:stride,
                           j:j + stride * OW:stride])     # (B, C, OH, OW)
    col = jnp.stack(cols, axis=2)                          # (B, C, k*k, OH, OW)
    col = col.transpose(0, 3, 4, 1, 2).reshape(B, OH * OW, C * ksize * ksize)
    return col


def init_branch_params(key, in_ch, conv_f, hidden, proj):
    """Deterministic parameter init (shapes follow the PyTorch modules)."""
    k = jax.random.split(key, 6)
    ksz = 3
    # PyTorch conv weight (F, C, kh, kw) -> (C*kh*kw, F) for the im2col matmul.
    wc_torch = 0.1 * jax.random.normal(k[0], (conv_f, in_ch, ksz, ksz), jnp.float32)
    wc = wc_torch.reshape(conv_f, in_ch * ksz * ksz).T           # (K, F)
    bc = 0.1 * jax.random.normal(k[1], (1, conv_f), jnp.float32)
    w1 = 0.1 * jax.random.normal(k[2], (conv_f, hidden), jnp.float32)
    b1 = 0.1 * jax.random.normal(k[3], (1, hidden), jnp.float32)
    w2 = 0.1 * jax.random.normal(k[4], (hidden, proj), jnp.float32)
    b2 = 0.1 * jax.random.normal(k[5], (1, proj), jnp.float32)
    return (wc, bc, w1, b1, w2, b2)


@jax.jit
def simclr_multi_forward(t0, t1, params1, params2):
    """Equivalent of SimCLR_multi.forward(t) -> (o1, o2)."""
    B = t0.shape[0]
    # im2col -> bf16 directly (single fused XLA stage; no f32 K-padded copy).
    p0 = _im2col(t0).astype(jnp.bfloat16)
    p1 = _im2col(t1).astype(jnp.bfloat16)
    _, OHW, K = p0.shape

    F = params1[0].shape[1]
    H = params1[2].shape[1]
    P = params1[4].shape[1]
    Fp = _round_up(F, _LANE)
    Hp = _round_up(H, _LANE)
    Pp = _round_up(P, _LANE)

    def _stack(a1, a2):
        return jnp.stack([a1, a2], axis=0)

    # Pad the batch to a multiple of 16 so the batch tile is bf16 sublane-aligned.
    Bp = _round_up(B, 16)
    patches = _pad_axis(_stack(p0, p1), 1, Bp)                     # (2, Bp, OHW, K) bf16

    # Weights: lane dims padded to 128 (MXU-filling, lane-dense); K stays 36.
    wc = _pad_axis(_stack(params1[0], params2[0]), 2, Fp).astype(jnp.bfloat16)   # (2, K, Fp)
    w1 = _pad_axis(_pad_axis(_stack(params1[2], params2[2]), 1, Fp), 2, Hp).astype(jnp.bfloat16)
    w2 = _pad_axis(_pad_axis(_stack(params1[4], params2[4]), 1, Hp), 2, Pp).astype(jnp.bfloat16)
    bc = _pad_axis(_stack(params1[1], params2[1]), 2, Fp).astype(jnp.float32)    # (2,1,Fp)
    b1 = _pad_axis(_stack(params1[3], params2[3]), 2, Hp).astype(jnp.float32)
    b2 = _pad_axis(_stack(params1[5], params2[5]), 2, Pp).astype(jnp.float32)

    TB = _pick_batch_tile(Bp, cap=64)
    nb = Bp // TB

    out = pl.pallas_call(
        _fused_kernel,
        out_shape=jax.ShapeDtypeStruct((2, Bp, Pp), jnp.bfloat16),
        grid_spec=pltpu.PrefetchScalarGridSpec(
            num_scalar_prefetch=0,
            grid=(2, nb),
            in_specs=[
                pl.BlockSpec((None, TB, OHW, K), lambda g, b: (g, b, 0, 0)),  # patches
                pl.BlockSpec((None, K, Fp), lambda g, b: (g, 0, 0)),          # conv weight
                pl.BlockSpec((None, 1, Fp), lambda g, b: (g, 0, 0)),          # conv bias
                pl.BlockSpec((None, Fp, Hp), lambda g, b: (g, 0, 0)),         # head W1
                pl.BlockSpec((None, 1, Hp), lambda g, b: (g, 0, 0)),          # head b1
                pl.BlockSpec((None, Hp, Pp), lambda g, b: (g, 0, 0)),         # head W2
                pl.BlockSpec((None, 1, Pp), lambda g, b: (g, 0, 0)),          # head b2
            ],
            out_specs=pl.BlockSpec((None, TB, Pp), lambda g, b: (g, b, 0)),
        ),
        compiler_params=pltpu.CompilerParams(
            dimension_semantics=("parallel", "parallel"),
            # TB=64 working set (patches + weights + conv temp + out, double
            # buffered) is ~6 MiB; 32 MiB fits every generation incl. v7x.
            vmem_limit_bytes=32 * 1024 * 1024),
    )(patches, wc, bc, w1, b1, w2, b2)

    o1 = out[0, :B, :P].astype(jnp.float32)
    o2 = out[1, :B, :P].astype(jnp.float32)
    return o1, o2


# ------------------------- pure-JAX reference (f32) ---------------------------
def _reference_branch(x, params):
    wc, bc, w1, b1, w2, b2 = params
    p = _im2col(x)
    conv = jnp.maximum(jnp.einsum("bpk,kf->bpf", p, wc) + bc, 0.0)
    feat = conv.mean(axis=1)
    h = jnp.maximum(feat @ w1 + b1, 0.0)
    return h @ w2 + b2


# --------------------------------- main ---------------------------------------
if __name__ == "__main__":
    B, C, H, W = 2, 4, 16, 16          # small shapes
    CONV_F, HIDDEN, PROJ = 8, 32, 16

    key = jax.random.PRNGKey(0)
    k_in0, k_in1, k_p1, k_p2 = jax.random.split(key, 4)

    # t is a pair of two augmented views, each NCHW.
    t0 = jax.random.normal(k_in0, (B, C, H, W), jnp.float32)
    t1 = jax.random.normal(k_in1, (B, C, H, W), jnp.float32)

    params1 = init_branch_params(k_p1, C, CONV_F, HIDDEN, PROJ)
    params2 = init_branch_params(k_p2, C, CONV_F, HIDDEN, PROJ)

    o1, o2 = simclr_multi_forward(t0, t1, params1, params2)
    jax.block_until_ready((o1, o2))
    assert o1.shape == (B, PROJ) and o2.shape == (B, PROJ)

    # Correctness vs f32 reference (bf16 MXU operands + bf16 output -> loose tol).
    r1 = _reference_branch(t0, params1)
    r2 = _reference_branch(t1, params2)
    assert jnp.allclose(o1, r1, atol=5e-2, rtol=5e-2)
    assert jnp.allclose(o2, r2, atol=5e-2, rtol=5e-2)

    print("KERNEL_OK")
</pallas_src>

<mosaic_0001>
module attributes {stable_mosaic.version = 11 : i64} {
  func.func @_fused_kernel(%arg0: i32, %arg1: i32, %arg2: memref<1x16x64x36xbf16, #tpu.memory_space<vmem>>, %arg3: memref<1x36x128xbf16, #tpu.memory_space<vmem>>, %arg4: memref<1x1x128xf32, #tpu.memory_space<vmem>>, %arg5: memref<1x128x128xbf16, #tpu.memory_space<vmem>>, %arg6: memref<1x1x128xf32, #tpu.memory_space<vmem>>, %arg7: memref<1x128x128xbf16, #tpu.memory_space<vmem>>, %arg8: memref<1x1x128xf32, #tpu.memory_space<vmem>>, %arg9: memref<1x16x128xbf16, #tpu.memory_space<vmem>>) attributes {dimension_semantics = [#tpu.dimension_semantics<parallel>, #tpu.dimension_semantics<parallel>], iteration_bounds = array<i64: 2, 1>, scalar_prefetch = 0 : i64, scratch_operands = 0 : i64, tpu.core_type = #tpu.core_type<tc>, window_params = [{transform_indices = @transform_0, window_bounds = array<i64: 1, 16, 64, 36>}, {transform_indices = @transform_1, window_bounds = array<i64: 1, 36, 128>}, {transform_indices = @transform_2, window_bounds = array<i64: 1, 1, 128>}, {transform_indices = @transform_3, window_bounds = array<i64: 1, 128, 128>}, {transform_indices = @transform_4, window_bounds = array<i64: 1, 1, 128>}, {transform_indices = @transform_5, window_bounds = array<i64: 1, 128, 128>}, {transform_indices = @transform_6, window_bounds = array<i64: 1, 1, 128>}, {transform_indices = @transform_7, window_bounds = array<i64: 1, 16, 128>}]} {
    %c0 = arith.constant 0 : index
    %c0_0 = arith.constant 0 : index
    %c0_1 = arith.constant 0 : index
    %c0_2 = arith.constant 0 : index
    %0 = vector.load %arg2[%c0, %c0_0, %c0_1, %c0_2] : memref<1x16x64x36xbf16, #tpu.memory_space<vmem>>, vector<1x16x64x36xbf16>
    %1 = vector.shape_cast %0 : vector<1x16x64x36xbf16> to vector<16x64x36xbf16>
    %2 = vector.shape_cast %1 : vector<16x64x36xbf16> to vector<1024x36xbf16>
    %c0_3 = arith.constant 0 : index
    %c0_4 = arith.constant 0 : index
    %c0_5 = arith.constant 0 : index
    %3 = vector.load %arg3[%c0_3, %c0_4, %c0_5] : memref<1x36x128xbf16, #tpu.memory_space<vmem>>, vector<1x36x128xbf16>
    %4 = vector.shape_cast %3 : vector<1x36x128xbf16> to vector<36x128xbf16>
    %cst = arith.constant dense<0.000000e+00> : vector<1024x128xf32>
    %5 = tpu.matmul %2, %4, %cst {dimension_numbers = #tpu.dot_dimension_numbers<[1], [0], [0], [1], [0, 0, 1, 1], [], []>} : vector<1024x36xbf16>, vector<36x128xbf16>, vector<1024x128xf32> -> vector<1024x128xf32>
    %c0_6 = arith.constant 0 : index
    %c0_7 = arith.constant 0 : index
    %c0_8 = arith.constant 0 : index
    %6 = vector.load %arg4[%c0_6, %c0_7, %c0_8] : memref<1x1x128xf32, #tpu.memory_space<vmem>>, vector<1x1x128xf32>
    %7 = vector.shape_cast %6 : vector<1x1x128xf32> to vector<1x128xf32>
    %8 = vector.broadcast %7 : vector<1x128xf32> to vector<1024x128xf32>
    %9 = arith.addf %5, %8 : vector<1024x128xf32>
    %cst_9 = arith.constant 0.000000e+00 : f32
    %10 = vector.broadcast %cst_9 : f32 to vector<1024x128xf32>
    %11 = arith.maximumf %9, %10 : vector<1024x128xf32>
    %12 = arith.truncf %11 : vector<1024x128xf32> to vector<1024x128xbf16>
    %13 = vector.shape_cast %12 : vector<1024x128xbf16> to vector<16x64x128xbf16>
    %14 = arith.extf %13 : vector<16x64x128xbf16> to vector<16x64x128xf32>
    %cst_10 = arith.constant dense<0.000000e+00> : vector<16x128xf32>
    %15 = vector.multi_reduction <add>, %14, %cst_10 [1] : vector<16x64x128xf32> to vector<16x128xf32>
    %cst_11 = arith.constant 1.562500e-02 : f32
    %16 = vector.broadcast %cst_11 : f32 to vector<16x128xf32>
    %17 = arith.mulf %15, %16 : vector<16x128xf32>
    %18 = arith.truncf %17 : vector<16x128xf32> to vector<16x128xbf16>
    %c0_12 = arith.constant 0 : index
    %c0_13 = arith.constant 0 : index
    %c0_14 = arith.constant 0 : index
    %19 = vector.load %arg5[%c0_12, %c0_13, %c0_14] : memref<1x128x128xbf16, #tpu.memory_space<vmem>>, vector<1x128x128xbf16>
    %20 = vector.shape_cast %19 : vector<1x128x128xbf16> to vector<128x128xbf16>
    %cst_15 = arith.constant dense<0.000000e+00> : vector<16x128xf32>
    %21 = tpu.matmul %18, %20, %cst_15 {dimension_numbers = #tpu.dot_dimension_numbers<[1], [0], [0], [1], [0, 0, 1, 1], [], []>} : vector<16x128xbf16>, vector<128x128xbf16>, vector<16x128xf32> -> vector<16x128xf32>
    %c0_16 = arith.constant 0 : index
    %c0_17 = arith.constant 0 : index
    %c0_18 = arith.constant 0 : index
    %22 = vector.load %arg6[%c0_16, %c0_17, %c0_18] : memref<1x1x128xf32, #tpu.memory_space<vmem>>, vector<1x1x128xf32>
    %23 = vector.shape_cast %22 : vector<1x1x128xf32> to vector<1x128xf32>
    %24 = vector.broadcast %23 : vector<1x128xf32> to vector<16x128xf32>
    %25 = arith.addf %21, %24 : vector<16x128xf32>
    %cst_19 = arith.constant 0.000000e+00 : f32
    %26 = vector.broadcast %cst_19 : f32 to vector<16x128xf32>
    %27 = arith.maximumf %25, %26 : vector<16x128xf32>
    %28 = arith.truncf %27 : vector<16x128xf32> to vector<16x128xbf16>
    %c0_20 = arith.constant 0 : index
    %c0_21 = arith.constant 0 : index
    %c0_22 = arith.constant 0 : index
    %29 = vector.load %arg7[%c0_20, %c0_21, %c0_22] : memref<1x128x128xbf16, #tpu.memory_space<vmem>>, vector<1x128x128xbf16>
    %30 = vector.shape_cast %29 : vector<1x128x128xbf16> to vector<128x128xbf16>
    %cst_23 = arith.constant dense<0.000000e+00> : vector<16x128xf32>
    %31 = tpu.matmul %28, %30, %cst_23 {dimension_numbers = #tpu.dot_dimension_numbers<[1], [0], [0], [1], [0, 0, 1, 1], [], []>} : vector<16x128xbf16>, vector<128x128xbf16>, vector<16x128xf32> -> vector<16x128xf32>
    %c0_24 = arith.constant 0 : index
    %c0_25 = arith.constant 0 : index
    %c0_26 = arith.constant 0 : index
    %32 = vector.load %arg8[%c0_24, %c0_25, %c0_26] : memref<1x1x128xf32, #tpu.memory_space<vmem>>, vector<1x1x128xf32>
    %33 = vector.shape_cast %32 : vector<1x1x128xf32> to vector<1x128xf32>
    %34 = vector.broadcast %33 : vector<1x128xf32> to vector<16x128xf32>
    %35 = arith.addf %31, %34 : vector<16x128xf32>
    %36 = arith.truncf %35 : vector<16x128xf32> to vector<16x128xbf16>
    %c0_27 = arith.constant 0 : index
    %c0_28 = arith.constant 0 : index
    %c0_29 = arith.constant 0 : index
    %37 = vector.load %arg9[%c0_27, %c0_28, %c0_29] : memref<1x16x128xbf16, #tpu.memory_space<vmem>>, vector<1x16x128xbf16>
    %38 = vector.shape_cast %37 : vector<1x16x128xbf16> to vector<16x128xbf16>
    %39 = vector.shape_cast %36 : vector<16x128xbf16> to vector<1x16x128xbf16>
    tpu.vector_store %arg9[%c0_27, %c0_28, %c0_29], %39 {strides = array<i32>} : memref<1x16x128xbf16, #tpu.memory_space<vmem>>, vector<1x16x128xbf16>,
    return
  }
  func.func @transform_0(%arg0: i32, %arg1: i32) -> (i32, i32, i32, i32) {
    %c0_i32 = arith.constant 0 : i32
    %c0_i32_0 = arith.constant 0 : i32
    %c0_i32_1 = arith.constant 0 : i32
    return %arg0, %arg1, %c0_i32, %c0_i32_0 : i32, i32, i32, i32
  }
  func.func @transform_1(%arg0: i32, %arg1: i32) -> (i32, i32, i32) {
    %c0_i32 = arith.constant 0 : i32
    %c0_i32_0 = arith.constant 0 : i32
    %c0_i32_1 = arith.constant 0 : i32
    return %arg0, %c0_i32, %c0_i32_0 : i32, i32, i32
  }
  func.func @transform_2(%arg0: i32, %arg1: i32) -> (i32, i32, i32) {
    %c0_i32 = arith.constant 0 : i32
    %c0_i32_0 = arith.constant 0 : i32
    %c0_i32_1 = arith.constant 0 : i32
    return %arg0, %c0_i32, %c0_i32_0 : i32, i32, i32
  }
  func.func @transform_3(%arg0: i32, %arg1: i32) -> (i32, i32, i32) {
    %c0_i32 = arith.constant 0 : i32
    %c0_i32_0 = arith.constant 0 : i32
    %c0_i32_1 = arith.constant 0 : i32
    return %arg0, %c0_i32, %c0_i32_0 : i32, i32, i32
  }
  func.func @transform_4(%arg0: i32, %arg1: i32) -> (i32, i32, i32) {
    %c0_i32 = arith.constant 0 : i32
    %c0_i32_0 = arith.constant 0 : i32
    %c0_i32_1 = arith.constant 0 : i32
    return %arg0, %c0_i32, %c0_i32_0 : i32, i32, i32
  }
  func.func @transform_5(%arg0: i32, %arg1: i32) -> (i32, i32, i32) {
    %c0_i32 = arith.constant 0 : i32
    %c0_i32_0 = arith.constant 0 : i32
    %c0_i32_1 = arith.constant 0 : i32
    return %arg0, %c0_i32, %c0_i32_0 : i32, i32, i32
  }
  func.func @transform_6(%arg0: i32, %arg1: i32) -> (i32, i32, i32) {
    %c0_i32 = arith.constant 0 : i32
    %c0_i32_0 = arith.constant 0 : i32
    %c0_i32_1 = arith.constant 0 : i32
    return %arg0, %c0_i32, %c0_i32_0 : i32, i32, i32
  }
  func.func @transform_7(%arg0: i32, %arg1: i32) -> (i32, i32, i32) {
    %c0_i32 = arith.constant 0 : i32
    %c0_i32_0 = arith.constant 0 : i32
    return %arg0, %arg1, %c0_i32 : i32, i32, i32
  }
}

</mosaic_0001>

<llo_original>
// kernel: simclr_multi_forward.1
$region0: #{simclr_multi_forward.1}
  #allocation0 [shape = 'u32[]', space=smem, size = 0x4, offset = 0x4, fixed_abs, tag = 'smem constant byte address 0x4 - core index']
  #allocation1 [shape = 'u32[144,128]{1,0:T(1,128)}', space=vmem, size = 0x12000, scoped, tag = 'internal scratch']
  %s0 = inlined_call_operand.vmem [shape: bf16[2,16,64,36], index: 0, kind: input, shape index: {}]
  %s1 = inlined_call_operand.vmem [shape: bf16[2,36,128], index: 1, kind: input, shape index: {}]
  %s2 = inlined_call_operand.vmem [shape: f32[2,1,128], index: 2, kind: input, shape index: {}]
  %s3 = inlined_call_operand.vmem [shape: bf16[2,128,128], index: 3, kind: input, shape index: {}]
  %s4 = inlined_call_operand.vmem [shape: f32[2,1,128], index: 4, kind: input, shape index: {}]
  %s5 = inlined_call_operand.vmem [shape: bf16[2,128,128], index: 5, kind: input, shape index: {}]
  %s6 = inlined_call_operand.vmem [shape: f32[2,1,128], index: 6, kind: input, shape index: {}]
  %s7 = inlined_call_operand.vmem [shape: bf16[2,16,128], index: 7, kind: output, shape index: {}]
  %s8 = sld [smem:[#allocation0]]
  $region61: #{simclr_multi_forward.1} parent=0
    _
  %s10 = ssub.s32 1, %s8
  %s11 = scalar_select 0, %s10, %s8
  loop: start=0, step=1, limit=4
  $region2: #{simclr_multi_forward.1} parent=0 // loop_pre_header
    _
  $region3: #{simclr_multi_forward.1} parent=0 // loop_header
    %s13 = sphi 0, %s17
    %p14 = scmp.ge.s32.totalorder %s13, 4
    %s20 = sphi 0, %s32
    %s21 = sphi 0, %s28
    %s22 = sphi 0, %s20
    %s23 = sphi 0, %s21
    %s24 = sphi 0, %s22
    %s25 = sphi 0, %s23
    %s37 = sphi 0, %s39
    %s40 = sphi 0, %s37
    %s41 = sphi 0, %s40
    %s57 = sphi 0, %s41
    %s63 = sphi 0, %s65
    %s66 = sphi 0, %s63
    %s67 = sphi 0, %s66
    %s83 = sphi 0, %s67
    %s89 = sphi 0, %s91
    %s92 = sphi 0, %s89
    %s93 = sphi 0, %s92
    %s109 = sphi 0, %s93
    %s115 = sphi 0, %s117
    %s118 = sphi 0, %s115
    %s119 = sphi 0, %s118
    %s135 = sphi 0, %s119
    %s141 = sphi 0, %s143
    %s144 = sphi 0, %s141
    %s145 = sphi 0, %s144
    %s161 = sphi 0, %s145
    %s167 = sphi 0, %s169
    %s170 = sphi 0, %s167
    %s171 = sphi 0, %s170
    %s187 = sphi 0, %s171
    %s193 = sphi 0, %s195
    %s196 = sphi 0, %s193
    %s197 = sphi 0, %s196
    %s213 = sphi 0, %s197
    %s221 = sphi 0, %s223
    %s224 = sphi 0, %s221
    %s225 = sphi 0, %s224
    %s241 = sphi 0, %s225
  $region4: #{simclr_multi_forward.1} parent=0 // loop_header_branch
    %16 = sbr.rel (%p14) target = $region8
  $region5: #{simclr_multi_forward.1} parent=0 // loop_body
    %s18 = ssub.s32 %s13, 1
    %s19 = ssub.s32 %s13, 2
    %s26 = sadd.s32 1, %s21
    %p27 = scmp.ge.s32.totalorder %s26, 1
    %s28 = scalar_select %p27, 0, %s26
    %s29 = sadd.s32 1, %s20
    %s30 = scalar_select %p27, %s29, %s20
    %p31 = scmp.ge.s32.totalorder %s30, 2
    %s32 = scalar_select %p31, 0, %s30
    %s33 = ssub.s32 %s20, %s32
    %s34 = ssub.s32 %s21, %s28
    %s35 = sor.u32 %s33, %s34
    %p36 = scmp.eq.s32.totalorder %s35, 0
    %s38 = sadd.s32 %s37, 1
    %s39 = scalar_select %p36, %s37, %s38
    %p42 = pneg %p36
    %p43 = scmp.eq.s32.totalorder %s13, 1
    %p44 = por %p42, %p43
    %p45 = scmp.ne.s32.totalorder %s37, %s40
    %p46 = scmp.eq.s32.totalorder %s13, 0
    %p47 = por %p45, %p46
    %p48 = scmp.ne.s32.totalorder %s37, %s40
    %p49 = scmp.eq.s32.totalorder %s18, 1
    %p50 = por %p48, %p49
    %p51 = scmp.ne.s32.totalorder %s40, %s41
    %p52 = scmp.eq.s32.totalorder %s18, 0
    %p53 = por %p51, %p52
    %p54 = scmp.ne.s32.totalorder %s40, %s41
    %p55 = scmp.eq.s32.totalorder %s19, 1
    %p56 = por %p54, %p55
    %p58 = scmp.ne.s32.totalorder %s41, %s57
    %p59 = scmp.eq.s32.totalorder %s19, 0
    %p60 = por %p58, %p59
    %s61 = ssub.s32 %s20, %s32
    %p62 = scmp.eq.s32.totalorder %s61, 0
    %s64 = sadd.s32 %s63, 1
    %s65 = scalar_select %p62, %s63, %s64
    %p68 = pneg %p62
    %p69 = scmp.eq.s32.totalorder %s13, 1
    %p70 = por %p68, %p69
    %p71 = scmp.ne.s32.totalorder %s63, %s66
    %p72 = scmp.eq.s32.totalorder %s13, 0
    %p73 = por %p71, %p72
    %p74 = scmp.ne.s32.totalorder %s63, %s66
    %p75 = scmp.eq.s32.totalorder %s18, 1
    %p76 = por %p74, %p75
    %p77 = scmp.ne.s32.totalorder %s66, %s67
    %p78 = scmp.eq.s32.totalorder %s18, 0
    %p79 = por %p77, %p78
    %p80 = scmp.ne.s32.totalorder %s66, %s67
    %p81 = scmp.eq.s32.totalorder %s19, 1
    %p82 = por %p80, %p81
    %p84 = scmp.ne.s32.totalorder %s67, %s83
    %p85 = scmp.eq.s32.totalorder %s19, 0
    %p86 = por %p84, %p85
    %s87 = ssub.s32 %s20, %s32
    %p88 = scmp.eq.s32.totalorder %s87, 0
    %s90 = sadd.s32 %s89, 1
    %s91 = scalar_select %p88, %s89, %s90
    %p94 = pneg %p88
    %p95 = scmp.eq.s32.totalorder %s13, 1
    %p96 = por %p94, %p95
    %p97 = scmp.ne.s32.totalorder %s89, %s92
    %p98 = scmp.eq.s32.totalorder %s13, 0
    %p99 = por %p97, %p98
    %p100 = scmp.ne.s32.totalorder %s89, %s92
    %p101 = scmp.eq.s32.totalorder %s18, 1
    %p102 = por %p100, %p101
    %p103 = scmp.ne.s32.totalorder %s92, %s93
    %p104 = scmp.eq.s32.totalorder %s18, 0
    %p105 = por %p103, %p104
    %p106 = scmp.ne.s32.totalorder %s92, %s93
    %p107 = scmp.eq.s32.totalorder %s19, 1
    %p108 = por %p106, %p107
    %p110 = scmp.ne.s32.totalorder %s93, %s109
    %p111 = scmp.eq.s32.totalorder %s19, 0
    %p112 = por %p110, %p111
    %s113 = ssub.s32 %s20, %s32
    %p114 = scmp.eq.s32.totalorder %s113, 0
    %s116 = sadd.s32 %s115, 1
    %s117 = scalar_select %p114, %s115, %s116
    %p120 = pneg %p114
    %p121 = scmp.eq.s32.totalorder %s13, 1
    %p122 = por %p120, %p121
    %p123 = scmp.ne.s32.totalorder %s115, %s118
    %p124 = scmp.eq.s32.totalorder %s13, 0
    %p125 = por %p123, %p124
    %p126 = scmp.ne.s32.totalorder %s115, %s118
    %p127 = scmp.eq.s32.totalorder %s18, 1
    %p128 = por %p126, %p127
    %p129 = scmp.ne.s32.totalorder %s118, %s119
    %p130 = scmp.eq.s32.totalorder %s18, 0
    %p131 = por %p129, %p130
    %p132 = scmp.ne.s32.totalorder %s118, %s119
    %p133 = scmp.eq.s32.totalorder %s19, 1
    %p134 = por %p132, %p133
    %p136 = scmp.ne.s32.totalorder %s119, %s135
    %p137 = scmp.eq.s32.totalorder %s19, 0
    %p138 = por %p136, %p137
    %s139 = ssub.s32 %s20, %s32
    %p140 = scmp.eq.s32.totalorder %s139, 0
    %s142 = sadd.s32 %s141, 1
    %s143 = scalar_select %p140, %s141, %s142
    %p146 = pneg %p140
    %p147 = scmp.eq.s32.totalorder %s13, 1
    %p148 = por %p146, %p147
    %p149 = scmp.ne.s32.totalorder %s141, %s144
    %p150 = scmp.eq.s32.totalorder %s13, 0
    %p151 = por %p149, %p150
    %p152 = scmp.ne.s32.totalorder %s141, %s144
    %p153 = scmp.eq.s32.totalorder %s18, 1
    %p154 = por %p152, %p153
    %p155 = scmp.ne.s32.totalorder %s144, %s145
    %p156 = scmp.eq.s32.totalorder %s18, 0
    %p157 = por %p155, %p156
    %p158 = scmp.ne.s32.totalorder %s144, %s145
    %p159 = scmp.eq.s32.totalorder %s19, 1
    %p160 = por %p158, %p159
    %p162 = scmp.ne.s32.totalorder %s145, %s161
    %p163 = scmp.eq.s32.totalorder %s19, 0
    %p164 = por %p162, %p163
    %s165 = ssub.s32 %s20, %s32
    %p166 = scmp.eq.s32.totalorder %s165, 0
    %s168 = sadd.s32 %s167, 1
    %s169 = scalar_select %p166, %s167, %s168
    %p172 = pneg %p166
    %p173 = scmp.eq.s32.totalorder %s13, 1
    %p174 = por %p172, %p173
    %p175 = scmp.ne.s32.totalorder %s167, %s170
    %p176 = scmp.eq.s32.totalorder %s13, 0
    %p177 = por %p175, %p176
    %p178 = scmp.ne.s32.totalorder %s167, %s170
    %p179 = scmp.eq.s32.totalorder %s18, 1
    %p180 = por %p178, %p179
    %p181 = scmp.ne.s32.totalorder %s170, %s171
    %p182 = scmp.eq.s32.totalorder %s18, 0
    %p183 = por %p181, %p182
    %p184 = scmp.ne.s32.totalorder %s170, %s171
    %p185 = scmp.eq.s32.totalorder %s19, 1
    %p186 = por %p184, %p185
    %p188 = scmp.ne.s32.totalorder %s171, %s187
    %p189 = scmp.eq.s32.totalorder %s19, 0
    %p190 = por %p188, %p189
    %s191 = ssub.s32 %s20, %s32
    %p192 = scmp.eq.s32.totalorder %s191, 0
    %s194 = sadd.s32 %s193, 1
    %s195 = scalar_select %p192, %s193, %s194
    %p198 = pneg %p192
    %p199 = scmp.eq.s32.totalorder %s13, 1
    %p200 = por %p198, %p199
    %p201 = scmp.ne.s32.totalorder %s193, %s196
    %p202 = scmp.eq.s32.totalorder %s13, 0
    %p203 = por %p201, %p202
    %p204 = scmp.ne.s32.totalorder %s193, %s196
    %p205 = scmp.eq.s32.totalorder %s18, 1
    %p206 = por %p204, %p205
    %p207 = scmp.ne.s32.totalorder %s196, %s197
    %p208 = scmp.eq.s32.totalorder %s18, 0
    %p209 = por %p207, %p208
    %p210 = scmp.ne.s32.totalorder %s196, %s197
    %p211 = scmp.eq.s32.totalorder %s19, 1
    %p212 = por %p210, %p211
    %p214 = scmp.ne.s32.totalorder %s197, %s213
    %p215 = scmp.eq.s32.totalorder %s19, 0
    %p216 = por %p214, %p215
    %s217 = ssub.s32 %s20, %s32
    %s218 = ssub.s32 %s21, %s28
    %s219 = sor.u32 %s217, %s218
    %p220 = scmp.eq.s32.totalorder %s219, 0
    %s222 = sadd.s32 %s221, 1
    %s223 = scalar_select %p220, %s221, %s222
    %p226 = pneg %p220
    %p227 = scmp.eq.s32.totalorder %s13, 1
    %p228 = por %p226, %p227
    %p229 = scmp.ne.s32.totalorder %s221, %s224
    %p230 = scmp.eq.s32.totalorder %s13, 0
    %p231 = por %p229, %p230
    %p232 = scmp.ne.s32.totalorder %s221, %s224
    %p233 = scmp.eq.s32.totalorder %s18, 1
    %p234 = por %p232, %p233
    %p235 = scmp.ne.s32.totalorder %s224, %s225
    %p236 = scmp.eq.s32.totalorder %s18, 0
    %p237 = por %p235, %p236
    %p238 = scmp.ne.s32.totalorder %s224, %s225
    %p239 = scmp.eq.s32.totalorder %s19, 1
    %p240 = por %p238, %p239
    %p242 = scmp.ne.s32.totalorder %s225, %s241
    %p243 = scmp.eq.s32.totalorder %s19, 0
    %p244 = por %p242, %p243
    %p245 = scmp.le.s32.totalorder 1, %s13
    %p246 = scmp.lt.s32.totalorder %s13, 3
    %p247 = pnand %p245, %p246
    %p248 = pneg %p247
    // Predicated region
    $region9: #{simclr_multi_forward.1} parent=5 // pred_check
      _
    $region10: #{simclr_multi_forward.1} parent=5 // pred_check_branch
      %250 = sbr.rel (%p247) target = $region12
    $region11: #{simclr_multi_forward.1} parent=5 // pred_region
      %s251 = ssub.s32 %s13, 1
    $region12: #{simclr_multi_forward.1} parent=5 // pred_fallthru
      _
    %p252 = scmp.lt.s32.totalorder %s13, 2
    // Predicated region
    $region13: #{simclr_multi_forward.1} parent=5 // pred_check
      %p253 = pneg %p252
    $region14: #{simclr_multi_forward.1} parent=5 // pred_check_branch
      %255 = sbr.rel (%p253) target = $region16
    $region15: #{simclr_multi_forward.1} parent=5 // pred_region
      // Predicated region
      $region17: #{simclr_multi_forward.1} parent=15 // pred_check
        %p256 = pneg %p47
      $region18: #{simclr_multi_forward.1} parent=15 // pred_check_branch
        %258 = sbr.rel (%p256) target = $region20
      $region19: #{simclr_multi_forward.1} parent=15 // pred_region
        %s259 = smul.u32 16, %s21
        %p260 = scmp.lt.s32.totalorder %s20, 1
        %s261 = scalar_select %p260, %s20, 1
        %p262 = scmp.lt.s32.totalorder %s259, 15
        %s263 = scalar_select %p262, %s259, 15
        %s264 = smul.addr %s263, 8
        %s265 = smul.addr %s261, 128
        %s266 = sadd.s32 %s264, %s265
        %s267 = smul.addr %s266, 4
        %s268 = scalar_lea.vmem %s0, %s267
        %s269 = smul.u32 16, %s21
      $region20: #{simclr_multi_forward.1} parent=15 // pred_fallthru
        _
      // Predicated region
      $region21: #{simclr_multi_forward.1} parent=15 // pred_check
        %p270 = pneg %p73
      $region22: #{simclr_multi_forward.1} parent=15 // pred_check_branch
        %272 = sbr.rel (%p270) target = $region24
      $region23: #{simclr_multi_forward.1} parent=15 // pred_region
        %p273 = scmp.lt.s32.totalorder %s20, 1
        %s274 = scalar_select %p273, %s20, 1
        %s275 = smul.addr %s274, 5
        %s276 = smul.addr %s275, 4
        %s277 = scalar_lea.vmem %s1, %s276
      $region24: #{simclr_multi_forward.1} parent=15 // pred_fallthru
        _
      // Predicated region
      $region25: #{simclr_multi_forward.1} parent=15 // pred_check
        %p278 = pneg %p99
      $region26: #{simclr_multi_forward.1} parent=15 // pred_check_branch
        %280 = sbr.rel (%p278) target = $region28
      $region27: #{simclr_multi_forward.1} parent=15 // pred_region
        %p281 = scmp.lt.s32.totalorder %s20, 1
        %s282 = scalar_select %p281, %s20, 1
        %s283 = scalar_lea.vmem %s2, %s282
      $region28: #{simclr_multi_forward.1} parent=15 // pred_fallthru
        _
      // Predicated region
      $region29: #{simclr_multi_forward.1} parent=15 // pred_check
        %p284 = pneg %p125
      $region30: #{simclr_multi_forward.1} parent=15 // pred_check_branch
        %286 = sbr.rel (%p284) target = $region32
      $region31: #{simclr_multi_forward.1} parent=15 // pred_region
        %p287 = scmp.lt.s32.totalorder %s20, 1
        %s288 = scalar_select %p287, %s20, 1
        %s289 = smul.addr %s288, 16
        %s290 = smul.addr %s289, 4
        %s291 = scalar_lea.vmem %s3, %s290
      $region32: #{simclr_multi_forward.1} parent=15 // pred_fallthru
        _
      // Predicated region
      $region33: #{simclr_multi_forward.1} parent=15 // pred_check
        %p292 = pneg %p151
      $region34: #{simclr_multi_forward.1} parent=15 // pred_check_branch
        %294 = sbr.rel (%p292) target = $region36
      $region35: #{simclr_multi_forward.1} parent=15 // pred_region
        %p295 = scmp.lt.s32.totalorder %s20, 1
        %s296 = scalar_select %p295, %s20, 1
        %s297 = scalar_lea.vmem %s4, %s296
      $region36: #{simclr_multi_forward.1} parent=15 // pred_fallthru
        _
      // Predicated region
      $region37: #{simclr_multi_forward.1} parent=15 // pred_check
        %p298 = pneg %p177
      $region38: #{simclr_multi_forward.1} parent=15 // pred_check_branch
        %300 = sbr.rel (%p298) target = $region40
      $region39: #{simclr_multi_forward.1} parent=15 // pred_region
        %p301 = scmp.lt.s32.totalorder %s20, 1
        %s302 = scalar_select %p301, %s20, 1
        %s303 = smul.addr %s302, 16
        %s304 = smul.addr %s303, 4
        %s305 = scalar_lea.vmem %s5, %s304
      $region40: #{simclr_multi_forward.1} parent=15 // pred_fallthru
        _
      // Predicated region
      $region41: #{simclr_multi_forward.1} parent=15 // pred_check
        %p306 = pneg %p203
      $region42: #{simclr_multi_forward.1} parent=15 // pred_check_branch
        %308 = sbr.rel (%p306) target = $region44
      $region43: #{simclr_multi_forward.1} parent=15 // pred_region
        %p309 = scmp.lt.s32.totalorder %s20, 1
        %s310 = scalar_select %p309, %s20, 1
        %s311 = scalar_lea.vmem %s6, %s310
      $region44: #{simclr_multi_forward.1} parent=15 // pred_fallthru
        _
    $region16: #{simclr_multi_forward.1} parent=5 // pred_fallthru
      _
    %p312 = scmp.le.s32.totalorder 1, %s13
    %p313 = scmp.lt.s32.totalorder %s13, 3
    %p314 = pnand %p312, %p313
    %p315 = pneg %p314
    // Predicated region
    $region45: #{simclr_multi_forward.1} parent=5 // pred_check
      _
    $region46: #{simclr_multi_forward.1} parent=5 // pred_check_branch
      %317 = sbr.rel (%p314) target = $region48
    $region47: #{simclr_multi_forward.1} parent=5 // pred_region
      %s318 = ssub.s32 %s13, 1
      %s319 = smul.u32 16, %s23
      %p320 = scmp.lt.s32.totalorder %s22, 1
      %s321 = scalar_select %p320, %s22, 1
      %p322 = scmp.lt.s32.totalorder %s319, 15
      %s323 = scalar_select %p322, %s319, 15
      %s324 = smul.addr %s323, 8
      %s325 = smul.addr %s321, 128
      %s326 = sadd.s32 %s324, %s325
      %s327 = smul.addr %s326, 4
      %s328 = scalar_lea.vmem %s0, %s327
      %p329 = pneg %p53
      %p330 = pneg %p50
      %p331 = scmp.lt.s32.totalorder %s22, 1
      %s332 = scalar_select %p331, %s22, 1
      %s333 = smul.addr %s332, 5
      %s334 = smul.addr %s333, 4
      %s335 = scalar_lea.vmem %s1, %s334
      %p336 = pneg %p79
      %p337 = pneg %p76
      %p338 = scmp.lt.s32.totalorder %s22, 1
      %s339 = scalar_select %p338, %s22, 1
      %s340 = scalar_lea.vmem %s2, %s339
      %p341 = pneg %p105
      %p342 = pneg %p102
      %p343 = scmp.lt.s32.totalorder %s22, 1
      %s344 = scalar_select %p343, %s22, 1
      %s345 = smul.addr %s344, 16
      %s346 = smul.addr %s345, 4
      %s347 = scalar_lea.vmem %s3, %s346
      %p348 = pneg %p131
      %p349 = pneg %p128
      %p350 = scmp.lt.s32.totalorder %s22, 1
      %s351 = scalar_select %p350, %s22, 1
      %s352 = scalar_lea.vmem %s4, %s351
      %p353 = pneg %p157
      %p354 = pneg %p154
      %p355 = scmp.lt.s32.totalorder %s22, 1
      %s356 = scalar_select %p355, %s22, 1
      %s357 = smul.addr %s356, 16
      %s358 = smul.addr %s357, 4
      %s359 = scalar_lea.vmem %s5, %s358
      %p360 = pneg %p183
      %p361 = pneg %p180
      %p362 = scmp.lt.s32.totalorder %s22, 1
      %s363 = scalar_select %p362, %s22, 1
      %s364 = scalar_lea.vmem %s6, %s363
      %p365 = pneg %p209
      %p366 = pneg %p206
      %p367 = pneg %p237
      %p368 = pneg %p234
      %s369 = smul.u32 2, %s23
      %p370 = scmp.lt.s32.totalorder %s22, 1
      %s371 = scalar_select %p370, %s22, 1
      %p372 = scmp.lt.s32.totalorder %s369, 1
      %s373 = scalar_select %p372, %s369, 1
      %s374 = smul.addr %s371, 2
      %s375 = sadd.s32 %s373, %s374
      %s376 = smul.addr %s375, 4
      %s377 = scalar_lea.vmem %s7, %s376
      %s378 = smul.u32 16, %s23
      %p379 = scmp.lt.s32.totalorder %s22, 1
      %s380 = scalar_select %p379, %s22, 1
      %p381 = scmp.lt.s32.totalorder %s378, 15
      %s382 = scalar_select %p381, %s378, 15
      %s383 = smul.addr %s382, 8
      %s384 = smul.addr %s380, 128
      %s385 = sadd.s32 %s383, %s384
      %s386 = smul.addr %s385, 4
      %s387 = scalar_lea.vmem %s0, %s386
      %s388 = smul.u32 16, %s23
      %p389 = scmp.lt.s32.totalorder %s22, 1
      %s390 = scalar_select %p389, %s22, 1
      %s391 = smul.addr %s390, 5
      %s392 = smul.addr %s391, 4
      %s393 = scalar_lea.vmem %s1, %s392
      %p394 = scmp.lt.s32.totalorder %s22, 1
      %s395 = scalar_select %p394, %s22, 1
      %s396 = scalar_lea.vmem %s2, %s395
      %p397 = scmp.lt.s32.totalorder %s22, 1
      %s398 = scalar_select %p397, %s22, 1
      %s399 = smul.addr %s398, 16
      %s400 = smul.addr %s399, 4
      %s401 = scalar_lea.vmem %s3, %s400
      %p402 = scmp.lt.s32.totalorder %s22, 1
      %s403 = scalar_select %p402, %s22, 1
      %s404 = scalar_lea.vmem %s4, %s403
      %p405 = scmp.lt.s32.totalorder %s22, 1
      %s406 = scalar_select %p405, %s22, 1
      %s407 = smul.addr %s406, 16
      %s408 = smul.addr %s407, 4
      %s409 = scalar_lea.vmem %s5, %s408
      %p410 = scmp.lt.s32.totalorder %s22, 1
      %s411 = scalar_select %p410, %s22, 1
      %s412 = scalar_lea.vmem %s6, %s411
      %s413 = smul.u32 2, %s23
      %p414 = scmp.lt.s32.totalorder %s22, 1
      %s415 = scalar_select %p414, %s22, 1
      %p416 = scmp.lt.s32.totalorder %s413, 1
      %s417 = scalar_select %p416, %s413, 1
      %s418 = smul.addr %s415, 2
      %s419 = sadd.s32 %s417, %s418
      %s420 = smul.addr %s419, 4
      %s421 = scalar_lea.vmem %s7, %s420
      %s422 = smul.u32 2, %s23
      %v424 = vld [vmem:[%s387] sm:$0xf]
      %v425 = vld [vmem:[%s387 + $0x4] sm:$0xf]
      %v426 = vld [vmem:[%s387 + $0x8] sm:$0xf]
      %v427 = vld [vmem:[%s387 + $0xc] sm:$0xf]
      %v428 = vld [vmem:[%s387 + $0x10] sm:$0xf]
      %v429 = vld [vmem:[%s387 + $0x14] sm:$0xf]
      %v430 = vld [vmem:[%s387 + $0x18] sm:$0xf]
      %v431 = vld [vmem:[%s387 + $0x1c] sm:$0xf]
      %v432 = vld [vmem:[%s387 + $0x20] sm:$0xf]
      %v433 = vld [vmem:[%s387 + $0x24] sm:$0xf]
      %v434 = vld [vmem:[%s387 + $0x28] sm:$0xf]
      %v435 = vld [vmem:[%s387 + $0x2c] sm:$0xf]
      %v436 = vld [vmem:[%s387 + $0x30] sm:$0xf]
      %v437 = vld [vmem:[%s387 + $0x34] sm:$0xf]
      %v438 = vld [vmem:[%s387 + $0x38] sm:$0xf]
      %v439 = vld [vmem:[%s387 + $0x3c] sm:$0xf]
      %v440 = vld [vmem:[%s387 + $0x40] sm:$0xf]
      %v441 = vld [vmem:[%s387 + $0x44] sm:$0xf]
      %v442 = vld [vmem:[%s387 + $0x48] sm:$0xf]
      %v443 = vld [vmem:[%s387 + $0x4c] sm:$0xf]
      %v444 = vld [vmem:[%s387 + $0x50] sm:$0xf]
      %v445 = vld [vmem:[%s387 + $0x54] sm:$0xf]
      %v446 = vld [vmem:[%s387 + $0x58] sm:$0xf]
      %v447 = vld [vmem:[%s387 + $0x5c] sm:$0xf]
      %v448 = vld [vmem:[%s387 + $0x60] sm:$0xf]
      %v449 = vld [vmem:[%s387 + $0x64] sm:$0xf]
      %v450 = vld [vmem:[%s387 + $0x68] sm:$0xf]
      %v451 = vld [vmem:[%s387 + $0x6c] sm:$0xf]
      %v452 = vld [vmem:[%s387 + $0x70] sm:$0xf]
      %v453 = vld [vmem:[%s387 + $0x74] sm:$0xf]
      %v454 = vld [vmem:[%s387 + $0x78] sm:$0xf]
      %v455 = vld [vmem:[%s387 + $0x7c] sm:$0xf]
      %v456 = vld [vmem:[%s387 + $0x80] sm:$0xf]
      %v457 = vld [vmem:[%s387 + $0x84] sm:$0xf]
      %v458 = vld [vmem:[%s387 + $0x88] sm:$0xf]
      %v459 = vld [vmem:[%s387 + $0x8c] sm:$0xf]
      %v460 = vld [vmem:[%s387 + $0x90] sm:$0xf]
      %v461 = vld [vmem:[%s387 + $0x94] sm:$0xf]
      %v462 = vld [vmem:[%s387 + $0x98] sm:$0xf]
      %v463 = vld [vmem:[%s387 + $0x9c] sm:$0xf]
      %v464 = vld [vmem:[%s387 + $0xa0] sm:$0xf]
      %v465 = vld [vmem:[%s387 + $0xa4] sm:$0xf]
      %v466 = vld [vmem:[%s387 + $0xa8] sm:$0xf]
      %v467 = vld [vmem:[%s387 + $0xac] sm:$0xf]
      %v468 = vld [vmem:[%s387 + $0xb0] sm:$0xf]
      %v469 = vld [vmem:[%s387 + $0xb4] sm:$0xf]
      %v470 = vld [vmem:[%s387 + $0xb8] sm:$0xf]
      %v471 = vld [vmem:[%s387 + $0xbc] sm:$0xf]
      %v472 = vld [vmem:[%s387 + $0xc0] sm:$0xf]
      %v473 = vld [vmem:[%s387 + $0xc4] sm:$0xf]
      %v474 = vld [vmem:[%s387 + $0xc8] sm:$0xf]
      %v475 = vld [vmem:[%s387 + $0xcc] sm:$0xf]
      %v476 = vld [vmem:[%s387 + $0xd0] sm:$0xf]
      %v477 = vld [vmem:[%s387 + $0xd4] sm:$0xf]
      %v478 = vld [vmem:[%s387 + $0xd8] sm:$0xf]
      %v479 = vld [vmem:[%s387 + $0xdc] sm:$0xf]
      %v480 = vld [vmem:[%s387 + $0xe0] sm:$0xf]
      %v481 = vld [vmem:[%s387 + $0xe4] sm:$0xf]
      %v482 = vld [vmem:[%s387 + $0xe8] sm:$0xf]
      %v483 = vld [vmem:[%s387 + $0xec] sm:$0xf]
      %v484 = vld [vmem:[%s387 + $0xf0] sm:$0xf]
      %v485 = vld [vmem:[%s387 + $0xf4] sm:$0xf]
      %v486 = vld [vmem:[%s387 + $0xf8] sm:$0xf]
      %v487 = vld [vmem:[%s387 + $0xfc] sm:$0xf]
      %v488 = vld [vmem:[%s387 + $0x100] sm:$0xf]
      %v489 = vld [vmem:[%s387 + $0x104] sm:$0xf]
      %v490 = vld [vmem:[%s387 + $0x108] sm:$0xf]
      %v491 = vld [vmem:[%s387 + $0x10c] sm:$0xf]
      %v492 = vld [vmem:[%s387 + $0x110] sm:$0xf]
      %v493 = vld [vmem:[%s387 + $0x114] sm:$0xf]
      %v494 = vld [vmem:[%s387 + $0x118] sm:$0xf]
      %v495 = vld [vmem:[%s387 + $0x11c] sm:$0xf]
      %v496 = vld [vmem:[%s387 + $0x120] sm:$0xf]
      %v497 = vld [vmem:[%s387 + $0x124] sm:$0xf]
      %v498 = vld [vmem:[%s387 + $0x128] sm:$0xf]
      %v499 = vld [vmem:[%s387 + $0x12c] sm:$0xf]
      %v500 = vld [vmem:[%s387 + $0x130] sm:$0xf]
      %v501 = vld [vmem:[%s387 + $0x134] sm:$0xf]
      %v502 = vld [vmem:[%s387 + $0x138] sm:$0xf]
      %v503 = vld [vmem:[%s387 + $0x13c] sm:$0xf]
      %v504 = vld [vmem:[%s387 + $0x140] sm:$0xf]
      %v505 = vld [vmem:[%s387 + $0x144] sm:$0xf]
      %v506 = vld [vmem:[%s387 + $0x148] sm:$0xf]
      %v507 = vld [vmem:[%s387 + $0x14c] sm:$0xf]
      %v508 = vld [vmem:[%s387 + $0x150] sm:$0xf]
      %v509 = vld [vmem:[%s387 + $0x154] sm:$0xf]
      %v510 = vld [vmem:[%s387 + $0x158] sm:$0xf]
      %v511 = vld [vmem:[%s387 + $0x15c] sm:$0xf]
      %v512 = vld [vmem:[%s387 + $0x160] sm:$0xf]
      %v513 = vld [vmem:[%s387 + $0x164] sm:$0xf]
      %v514 = vld [vmem:[%s387 + $0x168] sm:$0xf]
      %v515 = vld [vmem:[%s387 + $0x16c] sm:$0xf]
      %v516 = vld [vmem:[%s387 + $0x170] sm:$0xf]
      %v517 = vld [vmem:[%s387 + $0x174] sm:$0xf]
      %v518 = vld [vmem:[%s387 + $0x178] sm:$0xf]
      %v519 = vld [vmem:[%s387 + $0x17c] sm:$0xf]
      %v520 = vld [vmem:[%s387 + $0x180] sm:$0xf]
      %v521 = vld [vmem:[%s387 + $0x184] sm:$0xf]
      %v522 = vld [vmem:[%s387 + $0x188] sm:$0xf]
      %v523 = vld [vmem:[%s387 + $0x18c] sm:$0xf]
      %v524 = vld [vmem:[%s387 + $0x190] sm:$0xf]
      %v525 = vld [vmem:[%s387 + $0x194] sm:$0xf]
      %v526 = vld [vmem:[%s387 + $0x198] sm:$0xf]
      %v527 = vld [vmem:[%s387 + $0x19c] sm:$0xf]
      %v528 = vld [vmem:[%s387 + $0x1a0] sm:$0xf]
      %v529 = vld [vmem:[%s387 + $0x1a4] sm:$0xf]
      %v530 = vld [vmem:[%s387 + $0x1a8] sm:$0xf]
      %v531 = vld [vmem:[%s387 + $0x1ac] sm:$0xf]
      %v532 = vld [vmem:[%s387 + $0x1b0] sm:$0xf]
      %v533 = vld [vmem:[%s387 + $0x1b4] sm:$0xf]
      %v534 = vld [vmem:[%s387 + $0x1b8] sm:$0xf]
      %v535 = vld [vmem:[%s387 + $0x1bc] sm:$0xf]
      %v536 = vld [vmem:[%s387 + $0x1c0] sm:$0xf]
      %v537 = vld [vmem:[%s387 + $0x1c4] sm:$0xf]
      %v538 = vld [vmem:[%s387 + $0x1c8] sm:$0xf]
      %v539 = vld [vmem:[%s387 + $0x1cc] sm:$0xf]
      %v540 = vld [vmem:[%s387 + $0x1d0] sm:$0xf]
      %v541 = vld [vmem:[%s387 + $0x1d4] sm:$0xf]
      %v542 = vld [vmem:[%s387 + $0x1d8] sm:$0xf]
      %v543 = vld [vmem:[%s387 + $0x1dc] sm:$0xf]
      %v544 = vld [vmem:[%s387 + $0x1e0] sm:$0xf]
      %v545 = vld [vmem:[%s387 + $0x1e4] sm:$0xf]
      %v546 = vld [vmem:[%s387 + $0x1e8] sm:$0xf]
      %v547 = vld [vmem:[%s387 + $0x1ec] sm:$0xf]
      %v548 = vld [vmem:[%s387 + $0x1f0] sm:$0xf]
      %v549 = vld [vmem:[%s387 + $0x1f4] sm:$0xf]
      %v550 = vld [vmem:[%s387 + $0x1f8] sm:$0xf]
      %v551 = vld [vmem:[%s387 + $0x1fc] sm:$0xf]
      %v552 = vld [vmem:[%s393] sm:$0xf]
      %v553 = vld [vmem:[%s393 + $0x4] sm:$0xf]
      %v554 = vld [vmem:[%s393 + $0x8] sm:$0xf]
      %v555 = vld [vmem:[%s393 + $0xc] sm:$0xf]
      %v556 = vld [vmem:[%s393 + $0x10] sm:$0x3]
      %v557 = vld [vmem:[%s396] sm:$0x1]
      %v559 = vlaneseq
      %v560 = vshrl.u32 %v559, 7
      %v561 = vsub.s32 0, %v560
      %v562 = vrot.slane %v557, %v561
      %v692 = vunpack.c.l.b16 %v424
      %v693 = vunpack.c.l.b16 %v425
      %v694 = vunpack.c.l.b16 %v426
      %v695 = vunpack.c.l.b16 %v427
      %v696 = vunpack.c.l.b16 %v428
      %v697 = vunpack.c.l.b16 %v429
      %v698 = vunpack.c.l.b16 %v430
      %v699 = vunpack.c.l.b16 %v431
      %v700 = vunpack.c.l.b16 %v432
      %v701 = vunpack.c.l.b16 %v433
      %v702 = vunpack.c.l.b16 %v434
      %v703 = vunpack.c.l.b16 %v435
      %v704 = vunpack.c.l.b16 %v436
      %v705 = vunpack.c.l.b16 %v437
      %v706 = vunpack.c.l.b16 %v438
      %v707 = vunpack.c.l.b16 %v439
      %v708 = vunpack.c.l.b16 %v440
      %v709 = vunpack.c.l.b16 %v441
      %v710 = vunpack.c.l.b16 %v442
      %v711 = vunpack.c.l.b16 %v443
      %v712 = vunpack.c.l.b16 %v444
      %v713 = vunpack.c.l.b16 %v445
      %v714 = vunpack.c.l.b16 %v446
      %v715 = vunpack.c.l.b16 %v447
      %v716 = vunpack.c.l.b16 %v448
      %v717 = vunpack.c.l.b16 %v449
      %v718 = vunpack.c.l.b16 %v450
      %v719 = vunpack.c.l.b16 %v451
      %v720 = vunpack.c.l.b16 %v452
      %v721 = vunpack.c.l.b16 %v453
      %v722 = vunpack.c.l.b16 %v454
      %v723 = vunpack.c.l.b16 %v455
      %v724 = vunpack.c.l.b16 %v456
      %v725 = vunpack.c.l.b16 %v457
      %v726 = vunpack.c.l.b16 %v458
      %v727 = vunpack.c.l.b16 %v459
      %v728 = vunpack.c.l.b16 %v460
      %v729 = vunpack.c.l.b16 %v461
      %v730 = vunpack.c.l.b16 %v462
      %v731 = vunpack.c.l.b16 %v463
      %v732 = vunpack.c.l.b16 %v464
      %v733 = vunpack.c.l.b16 %v465
      %v734 = vunpack.c.l.b16 %v466
      %v735 = vunpack.c.l.b16 %v467
      %v736 = vunpack.c.l.b16 %v468
      %v737 = vunpack.c.l.b16 %v469
      %v738 = vunpack.c.l.b16 %v470
      %v739 = vunpack.c.l.b16 %v471
      %v740 = vunpack.c.l.b16 %v472
      %v741 = vunpack.c.l.b16 %v473
      %v742 = vunpack.c.l.b16 %v474
      %v743 = vunpack.c.l.b16 %v475
      %v744 = vunpack.c.l.b16 %v476
      %v745 = vunpack.c.l.b16 %v477
      %v746 = vunpack.c.l.b16 %v478
      %v747 = vunpack.c.l.b16 %v479
      %v748 = vunpack.c.l.b16 %v480
      %v749 = vunpack.c.l.b16 %v481
      %v750 = vunpack.c.l.b16 %v482
      %v751 = vunpack.c.l.b16 %v483
      %v752 = vunpack.c.l.b16 %v484
      %v753 = vunpack.c.l.b16 %v485
      %v754 = vunpack.c.l.b16 %v486
      %v755 = vunpack.c.l.b16 %v487
      %v756 = vunpack.c.l.b16 %v488
      %v757 = vunpack.c.l.b16 %v489
      %v758 = vunpack.c.l.b16 %v490
      %v759 = vunpack.c.l.b16 %v491
      %v760 = vunpack.c.l.b16 %v492
      %v761 = vunpack.c.l.b16 %v493
      %v762 = vunpack.c.l.b16 %v494
      %v763 = vunpack.c.l.b16 %v495
      %v764 = vunpack.c.l.b16 %v496
      %v765 = vunpack.c.l.b16 %v497
      %v766 = vunpack.c.l.b16 %v498
      %v767 = vunpack.c.l.b16 %v499
      %v768 = vunpack.c.l.b16 %v500
      %v769 = vunpack.c.l.b16 %v501
      %v770 = vunpack.c.l.b16 %v502
      %v771 = vunpack.c.l.b16 %v503
      %v772 = vunpack.c.l.b16 %v504
      %v773 = vunpack.c.l.b16 %v505
      %v774 = vunpack.c.l.b16 %v506
      %v775 = vunpack.c.l.b16 %v507
      %v776 = vunpack.c.l.b16 %v508
      %v777 = vunpack.c.l.b16 %v509
      %v778 = vunpack.c.l.b16 %v510
      %v779 = vunpack.c.l.b16 %v511
      %v780 = vunpack.c.l.b16 %v512
      %v781 = vunpack.c.l.b16 %v513
      %v782 = vunpack.c.l.b16 %v514
      %v783 = vunpack.c.l.b16 %v515
      %v784 = vunpack.c.l.b16 %v516
      %v785 = vunpack.c.l.b16 %v517
      %v786 = vunpack.c.l.b16 %v518
      %v787 = vunpack.c.l.b16 %v519
      %v788 = vunpack.c.l.b16 %v520
      %v789 = vunpack.c.l.b16 %v521
      %v790 = vunpack.c.l.b16 %v522
      %v791 = vunpack.c.l.b16 %v523
      %v792 = vunpack.c.l.b16 %v524
      %v793 = vunpack.c.l.b16 %v525
      %v794 = vunpack.c.l.b16 %v526
      %v795 = vunpack.c.l.b16 %v527
      %v796 = vunpack.c.l.b16 %v528
      %v797 = vunpack.c.l.b16 %v529
      %v798 = vunpack.c.l.b16 %v530
      %v799 = vunpack.c.l.b16 %v531
      %v800 = vunpack.c.l.b16 %v532
      %v801 = vunpack.c.l.b16 %v533
      %v802 = vunpack.c.l.b16 %v534
      %v803 = vunpack.c.l.b16 %v535
      %v804 = vunpack.c.l.b16 %v536
      %v805 = vunpack.c.l.b16 %v537
      %v806 = vunpack.c.l.b16 %v538
      %v807 = vunpack.c.l.b16 %v539
      %v808 = vunpack.c.l.b16 %v540
      %v809 = vunpack.c.l.b16 %v541
      %v810 = vunpack.c.l.b16 %v542
      %v811 = vunpack.c.l.b16 %v543
      %v812 = vunpack.c.l.b16 %v544
      %v813 = vunpack.c.l.b16 %v545
      %v814 = vunpack.c.l.b16 %v546
      %v815 = vunpack.c.l.b16 %v547
      %v816 = vunpack.c.l.b16 %v548
      %v817 = vunpack.c.l.b16 %v549
      %v818 = vunpack.c.l.b16 %v550
      %v819 = vunpack.c.l.b16 %v551
      %v820 = vpack.c.b16 %v693, %v692
      %v821 = vpack.c.b16 %v695, %v694
      %v822 = vpack.c.b16 %v697, %v696
      %v823 = vpack.c.b16 %v699, %v698
      %v824 = vpack.c.b16 %v701, %v700
      %v825 = vpack.c.b16 %v703, %v702
      %v826 = vpack.c.b16 %v705, %v704
      %v827 = vpack.c.b16 %v707, %v706
      %v828 = vpack.c.b16 %v709, %v708
      %v829 = vpack.c.b16 %v711, %v710
      %v830 = vpack.c.b16 %v713, %v712
      %v831 = vpack.c.b16 %v715, %v714
      %v832 = vpack.c.b16 %v717, %v716
      %v833 = vpack.c.b16 %v719, %v718
      %v834 = vpack.c.b16 %v721, %v720
      %v835 = vpack.c.b16 %v723, %v722
      %v836 = vpack.c.b16 %v725, %v724
      %v837 = vpack.c.b16 %v727, %v726
      %v838 = vpack.c.b16 %v729, %v728
      %v839 = vpack.c.b16 %v731, %v730
      %v840 = vpack.c.b16 %v733, %v732
      %v841 = vpack.c.b16 %v735, %v734
      %v842 = vpack.c.b16 %v737, %v736
      %v843 = vpack.c.b16 %v739, %v738
      %v844 = vpack.c.b16 %v741, %v740
      %v845 = vpack.c.b16 %v743, %v742
      %v846 = vpack.c.b16 %v745, %v744
      %v847 = vpack.c.b16 %v747, %v746
      %v848 = vpack.c.b16 %v749, %v748
      %v849 = vpack.c.b16 %v751, %v750
      %v850 = vpack.c.b16 %v753, %v752
      %v851 = vpack.c.b16 %v755, %v754
      %v852 = vpack.c.b16 %v757, %v756
      %v853 = vpack.c.b16 %v759, %v758
      %v854 = vpack.c.b16 %v761, %v760
      %v855 = vpack.c.b16 %v763, %v762
      %v856 = vpack.c.b16 %v765, %v764
      %v857 = vpack.c.b16 %v767, %v766
      %v858 = vpack.c.b16 %v769, %v768
      %v859 = vpack.c.b16 %v771, %v770
      %v860 = vpack.c.b16 %v773, %v772
      %v861 = vpack.c.b16 %v775, %v774
      %v862 = vpack.c.b16 %v777, %v776
      %v863 = vpack.c.b16 %v779, %v778
      %v864 = vpack.c.b16 %v781, %v780
      %v865 = vpack.c.b16 %v783, %v782
      %v866 = vpack.c.b16 %v785, %v784
      %v867 = vpack.c.b16 %v787, %v786
      %v868 = vpack.c.b16 %v789, %v788
      %v869 = vpack.c.b16 %v791, %v790
      %v870 = vpack.c.b16 %v793, %v792
      %v871 = vpack.c.b16 %v795, %v794
      %v872 = vpack.c.b16 %v797, %v796
      %v873 = vpack.c.b16 %v799, %v798
      %v874 = vpack.c.b16 %v801, %v800
      %v875 = vpack.c.b16 %v803, %v802
      %v876 = vpack.c.b16 %v805, %v804
      %v877 = vpack.c.b16 %v807, %v806
      %v878 = vpack.c.b16 %v809, %v808
      %v879 = vpack.c.b16 %v811, %v810
      %v880 = vpack.c.b16 %v813, %v812
      %v881 = vpack.c.b16 %v815, %v814
      %v882 = vpack.c.b16 %v817, %v816
      %v883 = vpack.c.b16 %v819, %v818
      %v889 = vunpack.c.l.b16 %v552
      %v890 = vunpack.c.l.b16 %v553
      %v891 = vunpack.c.l.b16 %v554
      %v892 = vunpack.c.l.b16 %v555
      %v893 = vunpack.c.l.b16 %v556
      %v894 = vpack.c.b16 %v890, %v889
      %v895 = vpack.c.b16 %v892, %v891
      %v896 = vpack.c.b16 %v893, %v893
      %vm899 = vcmask 293888
      %v901 = vsel %vm899, %v820, 0
      %v904 = vsel %vm899, %v821, 0
      %v907 = vsel %vm899, %v822, 0
      %v910 = vsel %vm899, %v823, 0
      %v913 = vsel %vm899, %v824, 0
      %v916 = vsel %vm899, %v825, 0
      %v919 = vsel %vm899, %v826, 0
      %v922 = vsel %vm899, %v827, 0
      %v925 = vsel %vm899, %v828, 0
      %v928 = vsel %vm899, %v829, 0
      %v931 = vsel %vm899, %v830, 0
      %v934 = vsel %vm899, %v831, 0
      %v937 = vsel %vm899, %v832, 0
      %v940 = vsel %vm899, %v833, 0
      %v943 = vsel %vm899, %v834, 0
      %v946 = vsel %vm899, %v835, 0
      %v949 = vsel %vm899, %v836, 0
      %v952 = vsel %vm899, %v837, 0
      %v955 = vsel %vm899, %v838, 0
      %v958 = vsel %vm899, %v839, 0
      %v961 = vsel %vm899, %v840, 0
      %v964 = vsel %vm899, %v841, 0
      %v967 = vsel %vm899, %v842, 0
      %v970 = vsel %vm899, %v843, 0
      %v973 = vsel %vm899, %v844, 0
      %v976 = vsel %vm899, %v845, 0
      %v979 = vsel %vm899, %v846, 0
      %v982 = vsel %vm899, %v847, 0
      %v985 = vsel %vm899, %v848, 0
      %v988 = vsel %vm899, %v849, 0
      %v991 = vsel %vm899, %v850, 0
      %v994 = vsel %vm899, %v851, 0
      %v997 = vsel %vm899, %v852, 0
      %v1000 = vsel %vm899, %v853, 0
      %v1003 = vsel %vm899, %v854, 0
      %v1006 = vsel %vm899, %v855, 0
      %v1009 = vsel %vm899, %v856, 0
      %v1012 = vsel %vm899, %v857, 0
      %v1015 = vsel %vm899, %v858, 0
      %v1018 = vsel %vm899, %v859, 0
      %v1021 = vsel %vm899, %v860, 0
      %v1024 = vsel %vm899, %v861, 0
      %v1027 = vsel %vm899, %v862, 0
      %v1030 = vsel %vm899, %v863, 0
      %v1033 = vsel %vm899, %v864, 0
      %v1036 = vsel %vm899, %v865, 0
      %v1039 = vsel %vm899, %v866, 0
      %v1042 = vsel %vm899, %v867, 0
      %v1045 = vsel %vm899, %v868, 0
      %v1048 = vsel %vm899, %v869, 0
      %v1051 = vsel %vm899, %v870, 0
      %v1054 = vsel %vm899, %v871, 0
      %v1057 = vsel %vm899, %v872, 0
      %v1060 = vsel %vm899, %v873, 0
      %v1063 = vsel %vm899, %v874, 0
      %v1066 = vsel %vm899, %v875, 0
      %v1069 = vsel %vm899, %v876, 0
      %v1072 = vsel %vm899, %v877, 0
      %v1075 = vsel %vm899, %v878, 0
      %v1078 = vsel %vm899, %v879, 0
      %v1081 = vsel %vm899, %v880, 0
      %v1084 = vsel %vm899, %v881, 0
      %v1087 = vsel %vm899, %v882, 0
      %v1090 = vsel %vm899, %v883, 0
      %vm1092 = vcmask 1041408
      %v1094 = vsel %vm1092, %v896, 0
      %1096 = vmatprep.subr.bf16.mxu0 0
      %1097 = vmatpush1.bf16.msra.mxu0 0
      %1098 = vmatprep.subr.bf16.mxu0 0
      %1099 = vmatpush1.bf16.msra.mxu0 0
      %1100 = vmatprep.subr.bf16.mxu0 0
      %1101 = vmatpush1.bf16.msra.mxu0 0
      %1102 = vmatprep.subr.bf16.mxu0 0
      %1103 = vmatpush1.bf16.msra.mxu0 0
      %1104 = vmatprep.subr.bf16.mxu0 0
      %1105 = vmatpush1.bf16.msra.mxu0 0
      %1106 = vmatprep.subr.bf16.mxu0 0
      %1107 = vmatpush1.bf16.msra.mxu0 %v1094
      %1108 = vmatprep.subr.bf16.mxu0 0
      %1109 = vmatpush1.bf16.msra.mxu0 %v895
      %1110 = vmatprep.subr.bf16.mxu0 0
      %1111 = vmatpush1.bf16.msra.mxu0 %v894
      %1112 = vmatprep.subr.bf16.mxu0 0
      %1113 = vmatpush2.bf16.msra.mxu0 0
      %1114 = vmatprep.subr.bf16.mxu0 0
      %1115 = vmatpush2.bf16.msra.mxu0 0
      %1116 = vmatprep.subr.bf16.mxu0 0
      %1117 = vmatpush2.bf16.msra.mxu0 0
      %1118 = vmatprep.subr.bf16.mxu0 0
      %1119 = vmatpush2.bf16.msra.mxu0 0
      %1120 = vmatprep.subr.bf16.mxu0 0
      %1121 = vmatpush2.bf16.msra.mxu0 0
      %1122 = vmatprep.subr.bf16.mxu0 0
      %1123 = vmatpush2.bf16.msra.mxu0 0
      %1124 = vmatprep.subr.bf16.mxu0 0
      %1125 = vmatpush2.bf16.msra.mxu0 0
      %1126 = vmatprep.subr.bf16.mxu0 0
      %1127 = vmatpush2.bf16.msra.mxu0 0
      %1128 = vmatprep.mubr.bf16.mxu0 0
      %1129 = vmatmul.mubr.bf16.gmra.mxu0 %v901
      %v1130 = vpop.f32.mrf.mxu0
      %v1131 = vadd.f32 %v562, %v1130
      %v1132 = vpop.f32.mrf.mxu0
      %v1133 = vpop.f32.mrf.mxu0
      %v1134 = vadd.f32 %v562, %v1133
      %v1135 = vpop.f32.mrf.mxu0
      %1136 = vmatprep.mubr.bf16.mxu0 0
      %1137 = vmatmul.mubr.bf16.gmra.mxu0 %v904
      %v1138 = vpop.f32.mrf.mxu0
      %v1139 = vadd.f32 %v562, %v1138
      %v1140 = vpop.f32.mrf.mxu0
      %v1141 = vpop.f32.mrf.mxu0
      %v1142 = vadd.f32 %v562, %v1141
      %v1143 = vpop.f32.mrf.mxu0
      %1144 = vmatprep.mubr.bf16.mxu0 0
      %1145 = vmatmul.mubr.bf16.gmra.mxu0 %v907
      %v1146 = vpop.f32.mrf.mxu0
      %v1147 = vadd.f32 %v562, %v1146
      %v1148 = vpop.f32.mrf.mxu0
      %v1149 = vpop.f32.mrf.mxu0
      %v1150 = vadd.f32 %v562, %v1149
      %v1151 = vpop.f32.mrf.mxu0
      %1152 = vmatprep.mubr.bf16.mxu0 0
      %1153 = vmatmul.mubr.bf16.gmra.mxu0 %v910
      %v1154 = vpop.f32.mrf.mxu0
      %v1155 = vadd.f32 %v562, %v1154
      %v1156 = vpop.f32.mrf.mxu0
      %v1157 = vpop.f32.mrf.mxu0
      %v1158 = vadd.f32 %v562, %v1157
      %v1159 = vpop.f32.mrf.mxu0
      %1160 = vmatprep.mubr.bf16.mxu0 0
      %1161 = vmatmul.mubr.bf16.gmra.mxu0 %v913
      %v1162 = vpop.f32.mrf.mxu0
      %v1163 = vadd.f32 %v562, %v1162
      %v1164 = vpop.f32.mrf.mxu0
      %v1165 = vpop.f32.mrf.mxu0
      %v1166 = vadd.f32 %v562, %v1165
      %v1167 = vpop.f32.mrf.mxu0
      %1168 = vmatprep.mubr.bf16.mxu0 0
      %1169 = vmatmul.mubr.bf16.gmra.mxu0 %v916
      %v1170 = vpop.f32.mrf.mxu0
      %v1171 = vadd.f32 %v562, %v1170
      %v1172 = vpop.f32.mrf.mxu0
      %v1173 = vpop.f32.mrf.mxu0
      %v1174 = vadd.f32 %v562, %v1173
      %v1175 = vpop.f32.mrf.mxu0
      %1176 = vmatprep.mubr.bf16.mxu0 0
      %1177 = vmatmul.mubr.bf16.gmra.mxu0 %v919
      %v1178 = vpop.f32.mrf.mxu0
      %v1179 = vadd.f32 %v562, %v1178
      %v1180 = vpop.f32.mrf.mxu0
      %v1181 = vpop.f32.mrf.mxu0
      %v1182 = vadd.f32 %v562, %v1181
      %v1183 = vpop.f32.mrf.mxu0
      %1184 = vmatprep.mubr.bf16.mxu0 0
      %1185 = vmatmul.mubr.bf16.gmra.mxu0 %v922
      %v1186 = vpop.f32.mrf.mxu0
      %v1187 = vadd.f32 %v562, %v1186
      %v1188 = vpop.f32.mrf.mxu0
      %v1189 = vpop.f32.mrf.mxu0
      %v1190 = vadd.f32 %v562, %v1189
      %v1191 = vpop.f32.mrf.mxu0
      %1192 = vmatprep.mubr.bf16.mxu0 0
      %1193 = vmatmul.mubr.bf16.gmra.mxu0 %v925
      %v1194 = vpop.f32.mrf.mxu0
      %v1195 = vadd.f32 %v562, %v1194
      %v1196 = vpop.f32.mrf.mxu0
      %v1197 = vpop.f32.mrf.mxu0
      %v1198 = vadd.f32 %v562, %v1197
      %v1199 = vpop.f32.mrf.mxu0
      %1200 = vmatprep.mubr.bf16.mxu0 0
      %1201 = vmatmul.mubr.bf16.gmra.mxu0 %v928
      %v1202 = vpop.f32.mrf.mxu0
      %v1203 = vadd.f32 %v562, %v1202
      %v1204 = vpop.f32.mrf.mxu0
      %v1205 = vpop.f32.mrf.mxu0
      %v1206 = vadd.f32 %v562, %v1205
      %v1207 = vpop.f32.mrf.mxu0
      %1208 = vmatprep.mubr.bf16.mxu0 0
      %1209 = vmatmul.mubr.bf16.gmra.mxu0 %v931
      %v1210 = vpop.f32.mrf.mxu0
      %v1211 = vadd.f32 %v562, %v1210
      %v1212 = vpop.f32.mrf.mxu0
      %v1213 = vpop.f32.mrf.mxu0
      %v1214 = vadd.f32 %v562, %v1213
      %v1215 = vpop.f32.mrf.mxu0
      %1216 = vmatprep.mubr.bf16.mxu0 0
      %1217 = vmatmul.mubr.bf16.gmra.mxu0 %v934
      %v1218 = vpop.f32.mrf.mxu0
      %v1219 = vadd.f32 %v562, %v1218
      %v1220 = vpop.f32.mrf.mxu0
      %v1221 = vpop.f32.mrf.mxu0
      %v1222 = vadd.f32 %v562, %v1221
      %v1223 = vpop.f32.mrf.mxu0
      %1224 = vmatprep.mubr.bf16.mxu0 0
      %1225 = vmatmul.mubr.bf16.gmra.mxu0 %v937
      %v1226 = vpop.f32.mrf.mxu0
      %v1227 = vadd.f32 %v562, %v1226
      %v1228 = vpop.f32.mrf.mxu0
      %v1229 = vpop.f32.mrf.mxu0
      %v1230 = vadd.f32 %v562, %v1229
      %v1231 = vpop.f32.mrf.mxu0
      %1232 = vmatprep.mubr.bf16.mxu0 0
      %1233 = vmatmul.mubr.bf16.gmra.mxu0 %v940
      %v1234 = vpop.f32.mrf.mxu0
      %v1235 = vadd.f32 %v562, %v1234
      %v1236 = vpop.f32.mrf.mxu0
      %v1237 = vpop.f32.mrf.mxu0
      %v1238 = vadd.f32 %v562, %v1237
      %v1239 = vpop.f32.mrf.mxu0
      %1240 = vmatprep.mubr.bf16.mxu0 0
      %1241 = vmatmul.mubr.bf16.gmra.mxu0 %v943
      %v1242 = vpop.f32.mrf.mxu0
      %v1243 = vadd.f32 %v562, %v1242
      %v1244 = vpop.f32.mrf.mxu0
      %v1245 = vpop.f32.mrf.mxu0
      %v1246 = vadd.f32 %v562, %v1245
      %v1247 = vpop.f32.mrf.mxu0
      %1248 = vmatprep.mubr.bf16.mxu0 0
      %1249 = vmatmul.mubr.bf16.gmra.mxu0 %v946
      %v1250 = vpop.f32.mrf.mxu0
      %v1251 = vadd.f32 %v562, %v1250
      %v1252 = vpop.f32.mrf.mxu0
      %v1253 = vpop.f32.mrf.mxu0
      %v1254 = vadd.f32 %v562, %v1253
      %v1255 = vpop.f32.mrf.mxu0
      %1256 = vmatprep.mubr.bf16.mxu0 0
      %1257 = vmatmul.mubr.bf16.gmra.mxu0 %v949
      %v1258 = vpop.f32.mrf.mxu0
      %v1259 = vadd.f32 %v562, %v1258
      %v1260 = vpop.f32.mrf.mxu0
      %v1261 = vpop.f32.mrf.mxu0
      %v1262 = vadd.f32 %v562, %v1261
      %v1263 = vpop.f32.mrf.mxu0
      %1264 = vmatprep.mubr.bf16.mxu0 0
      %1265 = vmatmul.mubr.bf16.gmra.mxu0 %v952
      %v1266 = vpop.f32.mrf.mxu0
      %v1267 = vadd.f32 %v562, %v1266
      %v1268 = vpop.f32.mrf.mxu0
      %v1269 = vpop.f32.mrf.mxu0
      %v1270 = vadd.f32 %v562, %v1269
      %v1271 = vpop.f32.mrf.mxu0
      %1272 = vmatprep.mubr.bf16.mxu0 0
      %1273 = vmatmul.mubr.bf16.gmra.mxu0 %v955
      %v1274 = vpop.f32.mrf.mxu0
      %v1275 = vadd.f32 %v562, %v1274
      %v1276 = vpop.f32.mrf.mxu0
      %v1277 = vpop.f32.mrf.mxu0
      %v1278 = vadd.f32 %v562, %v1277
      %v1279 = vpop.f32.mrf.mxu0
      %1280 = vmatprep.mubr.bf16.mxu0 0
      %1281 = vmatmul.mubr.bf16.gmra.mxu0 %v958
      %v1282 = vpop.f32.mrf.mxu0
      %v1283 = vadd.f32 %v562, %v1282
      %v1284 = vpop.f32.mrf.mxu0
      %v1285 = vpop.f32.mrf.mxu0
      %v1286 = vadd.f32 %v562, %v1285
      %v1287 = vpop.f32.mrf.mxu0
      %1288 = vmatprep.mubr.bf16.mxu0 0
      %1289 = vmatmul.mubr.bf16.gmra.mxu0 %v961
      %v1290 = vpop.f32.mrf.mxu0
      %v1291 = vadd.f32 %v562, %v1290
      %v1292 = vpop.f32.mrf.mxu0
      %v1293 = vpop.f32.mrf.mxu0
      %v1294 = vadd.f32 %v562, %v1293
      %v1295 = vpop.f32.mrf.mxu0
      %1296 = vmatprep.mubr.bf16.mxu0 0
      %1297 = vmatmul.mubr.bf16.gmra.mxu0 %v964
      %v1298 = vpop.f32.mrf.mxu0
      %v1299 = vadd.f32 %v562, %v1298
      %v1300 = vpop.f32.mrf.mxu0
      %v1301 = vpop.f32.mrf.mxu0
      %v1302 = vadd.f32 %v562, %v1301
      %v1303 = vpop.f32.mrf.mxu0
      %1304 = vmatprep.mubr.bf16.mxu0 0
      %1305 = vmatmul.mubr.bf16.gmra.mxu0 %v967
      %v1306 = vpop.f32.mrf.mxu0
      %v1307 = vadd.f32 %v562, %v1306
      %v1308 = vpop.f32.mrf.mxu0
      %v1309 = vpop.f32.mrf.mxu0
      %v1310 = vadd.f32 %v562, %v1309
      %v1311 = vpop.f32.mrf.mxu0
      %1312 = vmatprep.mubr.bf16.mxu0 0
      %1313 = vmatmul.mubr.bf16.gmra.mxu0 %v970
      %v1314 = vpop.f32.mrf.mxu0
      %v1315 = vadd.f32 %v562, %v1314
      %v1316 = vpop.f32.mrf.mxu0
      %v1317 = vpop.f32.mrf.mxu0
      %v1318 = vadd.f32 %v562, %v1317
      %v1319 = vpop.f32.mrf.mxu0
      %1320 = vmatprep.mubr.bf16.mxu0 0
      %1321 = vmatmul.mubr.bf16.gmra.mxu0 %v973
      %v1322 = vpop.f32.mrf.mxu0
      %v1323 = vadd.f32 %v562, %v1322
      %v1324 = vpop.f32.mrf.mxu0
      %v1325 = vpop.f32.mrf.mxu0
      %v1326 = vadd.f32 %v562, %v1325
      %v1327 = vpop.f32.mrf.mxu0
      %1328 = vmatprep.mubr.bf16.mxu0 0
      %1329 = vmatmul.mubr.bf16.gmra.mxu0 %v976
      %v1330 = vpop.f32.mrf.mxu0
      %v1331 = vadd.f32 %v562, %v1330
      %v1332 = vpop.f32.mrf.mxu0
      %v1333 = vpop.f32.mrf.mxu0
      %v1334 = vadd.f32 %v562, %v1333
      %v1335 = vpop.f32.mrf.mxu0
      %1336 = vmatprep.mubr.bf16.mxu0 0
      %1337 = vmatmul.mubr.bf16.gmra.mxu0 %v979
      %v1338 = vpop.f32.mrf.mxu0
      %v1339 = vadd.f32 %v562, %v1338
      %v1340 = vpop.f32.mrf.mxu0
      %v1341 = vpop.f32.mrf.mxu0
      %v1342 = vadd.f32 %v562, %v1341
      %v1343 = vpop.f32.mrf.mxu0
      %1344 = vmatprep.mubr.bf16.mxu0 0
      %1345 = vmatmul.mubr.bf16.gmra.mxu0 %v982
      %v1346 = vpop.f32.mrf.mxu0
      %v1347 = vadd.f32 %v562, %v1346
      %v1348 = vpop.f32.mrf.mxu0
      %v1349 = vpop.f32.mrf.mxu0
      %v1350 = vadd.f32 %v562, %v1349
      %v1351 = vpop.f32.mrf.mxu0
      %1352 = vmatprep.mubr.bf16.mxu0 0
      %1353 = vmatmul.mubr.bf16.gmra.mxu0 %v985
      %v1354 = vpop.f32.mrf.mxu0
      %v1355 = vadd.f32 %v562, %v1354
      %v1356 = vpop.f32.mrf.mxu0
      %v1357 = vpop.f32.mrf.mxu0
      %v1358 = vadd.f32 %v562, %v1357
      %v1359 = vpop.f32.mrf.mxu0
      %1360 = vmatprep.mubr.bf16.mxu0 0
      %1361 = vmatmul.mubr.bf16.gmra.mxu0 %v988
      %v1362 = vpop.f32.mrf.mxu0
      %v1363 = vadd.f32 %v562, %v1362
      %v1364 = vpop.f32.mrf.mxu0
      %v1365 = vpop.f32.mrf.mxu0
      %v1366 = vadd.f32 %v562, %v1365
      %v1367 = vpop.f32.mrf.mxu0
      %1368 = vmatprep.mubr.bf16.mxu0 0
      %1369 = vmatmul.mubr.bf16.gmra.mxu0 %v991
      %v1370 = vpop.f32.mrf.mxu0
      %v1371 = vadd.f32 %v562, %v1370
      %v1372 = vpop.f32.mrf.mxu0
      %v1373 = vpop.f32.mrf.mxu0
      %v1374 = vadd.f32 %v562, %v1373
      %v1375 = vpop.f32.mrf.mxu0
      %1376 = vmatprep.mubr.bf16.mxu0 0
      %1377 = vmatmul.mubr.bf16.gmra.mxu0 %v994
      %v1378 = vpop.f32.mrf.mxu0
      %v1379 = vadd.f32 %v562, %v1378
      %v1380 = vpop.f32.mrf.mxu0
      %v1381 = vpop.f32.mrf.mxu0
      %v1382 = vadd.f32 %v562, %v1381
      %v1383 = vpop.f32.mrf.mxu0
      %1384 = vmatprep.mubr.bf16.mxu0 0
      %1385 = vmatmul.mubr.bf16.gmra.mxu0 %v997
      %v1386 = vpop.f32.mrf.mxu0
      %v1387 = vadd.f32 %v562, %v1386
      %v1388 = vpop.f32.mrf.mxu0
      %v1389 = vpop.f32.mrf.mxu0
      %v1390 = vadd.f32 %v562, %v1389
      %v1391 = vpop.f32.mrf.mxu0
      %1392 = vmatprep.mubr.bf16.mxu0 0
      %1393 = vmatmul.mubr.bf16.gmra.mxu0 %v1000
      %v1394 = vpop.f32.mrf.mxu0
      %v1395 = vadd.f32 %v562, %v1394
      %v1396 = vpop.f32.mrf.mxu0
      %v1397 = vpop.f32.mrf.mxu0
      %v1398 = vadd.f32 %v562, %v1397
      %v1399 = vpop.f32.mrf.mxu0
      %1400 = vmatprep.mubr.bf16.mxu0 0
      %1401 = vmatmul.mubr.bf16.gmra.mxu0 %v1003
      %v1402 = vpop.f32.mrf.mxu0
      %v1403 = vadd.f32 %v562, %v1402
      %v1404 = vpop.f32.mrf.mxu0
      %v1405 = vpop.f32.mrf.mxu0
      %v1406 = vadd.f32 %v562, %v1405
      %v1407 = vpop.f32.mrf.mxu0
      %1408 = vmatprep.mubr.bf16.mxu0 0
      %1409 = vmatmul.mubr.bf16.gmra.mxu0 %v1006
      %v1410 = vpop.f32.mrf.mxu0
      %v1411 = vadd.f32 %v562, %v1410
      %v1412 = vpop.f32.mrf.mxu0
      %v1413 = vpop.f32.mrf.mxu0
      %v1414 = vadd.f32 %v562, %v1413
      %v1415 = vpop.f32.mrf.mxu0
      %1416 = vmatprep.mubr.bf16.mxu0 0
      %1417 = vmatmul.mubr.bf16.gmra.mxu0 %v1009
      %v1418 = vpop.f32.mrf.mxu0
      %v1419 = vadd.f32 %v562, %v1418
      %v1420 = vpop.f32.mrf.mxu0
      %v1421 = vpop.f32.mrf.mxu0
      %v1422 = vadd.f32 %v562, %v1421
      %v1423 = vpop.f32.mrf.mxu0
      %1424 = vmatprep.mubr.bf16.mxu0 0
      %1425 = vmatmul.mubr.bf16.gmra.mxu0 %v1012
      %v1426 = vpop.f32.mrf.mxu0
      %v1427 = vadd.f32 %v562, %v1426
      %v1428 = vpop.f32.mrf.mxu0
      %v1429 = vpop.f32.mrf.mxu0
      %v1430 = vadd.f32 %v562, %v1429
      %v1431 = vpop.f32.mrf.mxu0
      %1432 = vmatprep.mubr.bf16.mxu0 0
      %1433 = vmatmul.mubr.bf16.gmra.mxu0 %v1015
      %v1434 = vpop.f32.mrf.mxu0
      %v1435 = vadd.f32 %v562, %v1434
      %v1436 = vpop.f32.mrf.mxu0
      %v1437 = vpop.f32.mrf.mxu0
      %v1438 = vadd.f32 %v562, %v1437
      %v1439 = vpop.f32.mrf.mxu0
      %1440 = vmatprep.mubr.bf16.mxu0 0
      %1441 = vmatmul.mubr.bf16.gmra.mxu0 %v1018
      %v1442 = vpop.f32.mrf.mxu0
      %v1443 = vadd.f32 %v562, %v1442
      %v1444 = vpop.f32.mrf.mxu0
      %v1445 = vpop.f32.mrf.mxu0
      %v1446 = vadd.f32 %v562, %v1445
      %v1447 = vpop.f32.mrf.mxu0
      %1448 = vmatprep.mubr.bf16.mxu0 0
      %1449 = vmatmul.mubr.bf16.gmra.mxu0 %v1021
      %v1450 = vpop.f32.mrf.mxu0
      %v1451 = vadd.f32 %v562, %v1450
      %v1452 = vpop.f32.mrf.mxu0
      %v1453 = vpop.f32.mrf.mxu0
      %v1454 = vadd.f32 %v562, %v1453
      %v1455 = vpop.f32.mrf.mxu0
      %1456 = vmatprep.mubr.bf16.mxu0 0
      %1457 = vmatmul.mubr.bf16.gmra.mxu0 %v1024
      %v1458 = vpop.f32.mrf.mxu0
      %v1459 = vadd.f32 %v562, %v1458
      %v1460 = vpop.f32.mrf.mxu0
      %v1461 = vpop.f32.mrf.mxu0
      %v1462 = vadd.f32 %v562, %v1461
      %v1463 = vpop.f32.mrf.mxu0
      %1464 = vmatprep.mubr.bf16.mxu0 0
      %1465 = vmatmul.mubr.bf16.gmra.mxu0 %v1027
      %v1466 = vpop.f32.mrf.mxu0
      %v1467 = vadd.f32 %v562, %v1466
      %v1468 = vpop.f32.mrf.mxu0
      %v1469 = vpop.f32.mrf.mxu0
      %v1470 = vadd.f32 %v562, %v1469
      %v1471 = vpop.f32.mrf.mxu0
      %1472 = vmatprep.mubr.bf16.mxu0 0
      %1473 = vmatmul.mubr.bf16.gmra.mxu0 %v1030
      %v1474 = vpop.f32.mrf.mxu0
      %v1475 = vadd.f32 %v562, %v1474
      %v1476 = vpop.f32.mrf.mxu0
      %v1477 = vpop.f32.mrf.mxu0
      %v1478 = vadd.f32 %v562, %v1477
      %v1479 = vpop.f32.mrf.mxu0
      %1480 = vmatprep.mubr.bf16.mxu0 0
      %1481 = vmatmul.mubr.bf16.gmra.mxu0 %v1033
      %v1482 = vpop.f32.mrf.mxu0
      %v1483 = vadd.f32 %v562, %v1482
      %v1484 = vpop.f32.mrf.mxu0
      %v1485 = vpop.f32.mrf.mxu0
      %v1486 = vadd.f32 %v562, %v1485
      %v1487 = vpop.f32.mrf.mxu0
      %1488 = vmatprep.mubr.bf16.mxu0 0
      %1489 = vmatmul.mubr.bf16.gmra.mxu0 %v1036
      %v1490 = vpop.f32.mrf.mxu0
      %v1491 = vadd.f32 %v562, %v1490
      %v1492 = vpop.f32.mrf.mxu0
      %v1493 = vpop.f32.mrf.mxu0
      %v1494 = vadd.f32 %v562, %v1493
      %v1495 = vpop.f32.mrf.mxu0
      %1496 = vmatprep.mubr.bf16.mxu0 0
      %1497 = vmatmul.mubr.bf16.gmra.mxu0 %v1039
      %v1498 = vpop.f32.mrf.mxu0
      %v1499 = vadd.f32 %v562, %v1498
      %v1500 = vpop.f32.mrf.mxu0
      %v1501 = vpop.f32.mrf.mxu0
      %v1502 = vadd.f32 %v562, %v1501
      %v1503 = vpop.f32.mrf.mxu0
      %1504 = vmatprep.mubr.bf16.mxu0 0
      %1505 = vmatmul.mubr.bf16.gmra.mxu0 %v1042
      %v1506 = vpop.f32.mrf.mxu0
      %v1507 = vadd.f32 %v562, %v1506
      %v1508 = vpop.f32.mrf.mxu0
      %v1509 = vpop.f32.mrf.mxu0
      %v1510 = vadd.f32 %v562, %v1509
      %v1511 = vpop.f32.mrf.mxu0
      %1512 = vmatprep.mubr.bf16.mxu0 0
      %1513 = vmatmul.mubr.bf16.gmra.mxu0 %v1045
      %v1514 = vpop.f32.mrf.mxu0
      %v1515 = vadd.f32 %v562, %v1514
      %v1516 = vpop.f32.mrf.mxu0
      %v1517 = vpop.f32.mrf.mxu0
      %v1518 = vadd.f32 %v562, %v1517
      %v1519 = vpop.f32.mrf.mxu0
      %1520 = vmatprep.mubr.bf16.mxu0 0
      %1521 = vmatmul.mubr.bf16.gmra.mxu0 %v1048
      %v1522 = vpop.f32.mrf.mxu0
      %v1523 = vadd.f32 %v562, %v1522
      %v1524 = vpop.f32.mrf.mxu0
      %v1525 = vpop.f32.mrf.mxu0
      %v1526 = vadd.f32 %v562, %v1525
      %v1527 = vpop.f32.mrf.mxu0
      %1528 = vmatprep.mubr.bf16.mxu0 0
      %1529 = vmatmul.mubr.bf16.gmra.mxu0 %v1051
      %v1530 = vpop.f32.mrf.mxu0
      %v1531 = vadd.f32 %v562, %v1530
      %v1532 = vpop.f32.mrf.mxu0
      %v1533 = vpop.f32.mrf.mxu0
      %v1534 = vadd.f32 %v562, %v1533
      %v1535 = vpop.f32.mrf.mxu0
      %1536 = vmatprep.mubr.bf16.mxu0 0
      %1537 = vmatmul.mubr.bf16.gmra.mxu0 %v1054
      %v1538 = vpop.f32.mrf.mxu0
      %v1539 = vadd.f32 %v562, %v1538
      %v1540 = vpop.f32.mrf.mxu0
      %v1541 = vpop.f32.mrf.mxu0
      %v1542 = vadd.f32 %v562, %v1541
      %v1543 = vpop.f32.mrf.mxu0
      %1544 = vmatprep.mubr.bf16.mxu0 0
      %1545 = vmatmul.mubr.bf16.gmra.mxu0 %v1057
      %v1546 = vpop.f32.mrf.mxu0
      %v1547 = vadd.f32 %v562, %v1546
      %v1548 = vpop.f32.mrf.mxu0
      %v1549 = vpop.f32.mrf.mxu0
      %v1550 = vadd.f32 %v562, %v1549
      %v1551 = vpop.f32.mrf.mxu0
      %1552 = vmatprep.mubr.bf16.mxu0 0
      %1553 = vmatmul.mubr.bf16.gmra.mxu0 %v1060
      %v1554 = vpop.f32.mrf.mxu0
      %v1555 = vadd.f32 %v562, %v1554
      %v1556 = vpop.f32.mrf.mxu0
      %v1557 = vpop.f32.mrf.mxu0
      %v1558 = vadd.f32 %v562, %v1557
      %v1559 = vpop.f32.mrf.mxu0
      %1560 = vmatprep.mubr.bf16.mxu0 0
      %1561 = vmatmul.mubr.bf16.gmra.mxu0 %v1063
      %v1562 = vpop.f32.mrf.mxu0
      %v1563 = vadd.f32 %v562, %v1562
      %v1564 = vpop.f32.mrf.mxu0
      %v1565 = vpop.f32.mrf.mxu0
      %v1566 = vadd.f32 %v562, %v1565
      %v1567 = vpop.f32.mrf.mxu0
      %1568 = vmatprep.mubr.bf16.mxu0 0
      %1569 = vmatmul.mubr.bf16.gmra.mxu0 %v1066
      %v1570 = vpop.f32.mrf.mxu0
      %v1571 = vadd.f32 %v562, %v1570
      %v1572 = vpop.f32.mrf.mxu0
      %v1573 = vpop.f32.mrf.mxu0
      %v1574 = vadd.f32 %v562, %v1573
      %v1575 = vpop.f32.mrf.mxu0
      %1576 = vmatprep.mubr.bf16.mxu0 0
      %1577 = vmatmul.mubr.bf16.gmra.mxu0 %v1069
      %v1578 = vpop.f32.mrf.mxu0
      %v1579 = vadd.f32 %v562, %v1578
      %v1580 = vpop.f32.mrf.mxu0
      %v1581 = vpop.f32.mrf.mxu0
      %v1582 = vadd.f32 %v562, %v1581
      %v1583 = vpop.f32.mrf.mxu0
      %1584 = vmatprep.mubr.bf16.mxu0 0
      %1585 = vmatmul.mubr.bf16.gmra.mxu0 %v1072
      %v1586 = vpop.f32.mrf.mxu0
      %v1587 = vadd.f32 %v562, %v1586
      %v1588 = vpop.f32.mrf.mxu0
      %v1589 = vpop.f32.mrf.mxu0
      %v1590 = vadd.f32 %v562, %v1589
      %v1591 = vpop.f32.mrf.mxu0
      %1592 = vmatprep.mubr.bf16.mxu0 0
      %1593 = vmatmul.mubr.bf16.gmra.mxu0 %v1075
      %v1594 = vpop.f32.mrf.mxu0
      %v1595 = vadd.f32 %v562, %v1594
      %v1596 = vpop.f32.mrf.mxu0
      %v1597 = vpop.f32.mrf.mxu0
      %v1598 = vadd.f32 %v562, %v1597
      %v1599 = vpop.f32.mrf.mxu0
      %1600 = vmatprep.mubr.bf16.mxu0 0
      %1601 = vmatmul.mubr.bf16.gmra.mxu0 %v1078
      %v1602 = vpop.f32.mrf.mxu0
      %v1603 = vadd.f32 %v562, %v1602
      %v1604 = vpop.f32.mrf.mxu0
      %v1605 = vpop.f32.mrf.mxu0
      %v1606 = vadd.f32 %v562, %v1605
      %v1607 = vpop.f32.mrf.mxu0
      %1608 = vmatprep.mubr.bf16.mxu0 0
      %1609 = vmatmul.mubr.bf16.gmra.mxu0 %v1081
      %v1610 = vpop.f32.mrf.mxu0
      %v1611 = vadd.f32 %v562, %v1610
      %v1612 = vpop.f32.mrf.mxu0
      %v1613 = vpop.f32.mrf.mxu0
      %v1614 = vadd.f32 %v562, %v1613
      %v1615 = vpop.f32.mrf.mxu0
      %1616 = vmatprep.mubr.bf16.mxu0 0
      %1617 = vmatmul.mubr.bf16.gmra.mxu0 %v1084
      %v1618 = vpop.f32.mrf.mxu0
      %v1619 = vadd.f32 %v562, %v1618
      %v1620 = vpop.f32.mrf.mxu0
      %v1621 = vpop.f32.mrf.mxu0
      %v1622 = vadd.f32 %v562, %v1621
      %v1623 = vpop.f32.mrf.mxu0
      %1624 = vmatprep.mubr.bf16.mxu0 0
      %1625 = vmatmul.mubr.bf16.gmra.mxu0 %v1087
      %v1626 = vpop.f32.mrf.mxu0
      %v1627 = vadd.f32 %v562, %v1626
      %v1628 = vpop.f32.mrf.mxu0
      %v1629 = vpop.f32.mrf.mxu0
      %v1630 = vadd.f32 %v562, %v1629
      %v1631 = vpop.f32.mrf.mxu0
      %1632 = vmatprep.mubr.bf16.mxu0 0
      %1633 = vmatmul.mubr.bf16.gmra.mxu0 %v1090
      %v1634 = vpop.f32.mrf.mxu0
      %v1635 = vadd.f32 %v562, %v1634
      %v1636 = vpop.f32.mrf.mxu0
      %v1637 = vpop.f32.mrf.mxu0
      %v1638 = vadd.f32 %v562, %v1637
      %v1639 = vpop.f32.mrf.mxu0
      %1640 = vdwg.mxu0
      %v1641 = vmax.f32 %v1131, 0.0
      %v1642 = vmax.f32 %v1134, 0.0
      %v1643 = vmax.f32 %v1139, 0.0
      %v1644 = vmax.f32 %v1142, 0.0
      %v1645 = vmax.f32 %v1147, 0.0
      %v1646 = vmax.f32 %v1150, 0.0
      %v1647 = vmax.f32 %v1155, 0.0
      %v1648 = vmax.f32 %v1158, 0.0
      %v1649 = vmax.f32 %v1163, 0.0
      %v1650 = vmax.f32 %v1166, 0.0
      %v1651 = vmax.f32 %v1171, 0.0
      %v1652 = vmax.f32 %v1174, 0.0
      %v1653 = vmax.f32 %v1179, 0.0
      %v1654 = vmax.f32 %v1182, 0.0
      %v1655 = vmax.f32 %v1187, 0.0
      %v1656 = vmax.f32 %v1190, 0.0
      %v1657 = vmax.f32 %v1195, 0.0
      %v1658 = vmax.f32 %v1198, 0.0
      %v1659 = vmax.f32 %v1203, 0.0
      %v1660 = vmax.f32 %v1206, 0.0
      %v1661 = vmax.f32 %v1211, 0.0
      %v1662 = vmax.f32 %v1214, 0.0
      %v1663 = vmax.f32 %v1219, 0.0
      %v1664 = vmax.f32 %v1222, 0.0
      %v1665 = vmax.f32 %v1227, 0.0
      %v1666 = vmax.f32 %v1230, 0.0
      %v1667 = vmax.f32 %v1235, 0.0
      %v1668 = vmax.f32 %v1238, 0.0
      %v1669 = vmax.f32 %v1243, 0.0
      %v1670 = vmax.f32 %v1246, 0.0
      %v1671 = vmax.f32 %v1251, 0.0
      %v1672 = vmax.f32 %v1254, 0.0
      %v1673 = vmax.f32 %v1259, 0.0
      %v1674 = vmax.f32 %v1262, 0.0
      %v1675 = vmax.f32 %v1267, 0.0
      %v1676 = vmax.f32 %v1270, 0.0
      %v1677 = vmax.f32 %v1275, 0.0
      %v1678 = vmax.f32 %v1278, 0.0
      %v1679 = vmax.f32 %v1283, 0.0
      %v1680 = vmax.f32 %v1286, 0.0
      %v1681 = vmax.f32 %v1291, 0.0
      %v1682 = vmax.f32 %v1294, 0.0
      %v1683 = vmax.f32 %v1299, 0.0
      %v1684 = vmax.f32 %v1302, 0.0
      %v1685 = vmax.f32 %v1307, 0.0
      %v1686 = vmax.f32 %v1310, 0.0
      %v1687 = vmax.f32 %v1315, 0.0
      %v1688 = vmax.f32 %v1318, 0.0
      %v1689 = vmax.f32 %v1323, 0.0
      %v1690 = vmax.f32 %v1326, 0.0
      %v1691 = vmax.f32 %v1331, 0.0
      %v1692 = vmax.f32 %v1334, 0.0
      %v1693 = vmax.f32 %v1339, 0.0
      %v1694 = vmax.f32 %v1342, 0.0
      %v1695 = vmax.f32 %v1347, 0.0
      %v1696 = vmax.f32 %v1350, 0.0
      %v1697 = vmax.f32 %v1355, 0.0
      %v1698 = vmax.f32 %v1358, 0.0
      %v1699 = vmax.f32 %v1363, 0.0
      %v1700 = vmax.f32 %v1366, 0.0
      %v1701 = vmax.f32 %v1371, 0.0
      %v1702 = vmax.f32 %v1374, 0.0
      %v1703 = vmax.f32 %v1379, 0.0
      %v1704 = vmax.f32 %v1382, 0.0
      %v1705 = vmax.f32 %v1387, 0.0
      %v1706 = vmax.f32 %v1390, 0.0
      %v1707 = vmax.f32 %v1395, 0.0
      %v1708 = vmax.f32 %v1398, 0.0
      %v1709 = vmax.f32 %v1403, 0.0
      %v1710 = vmax.f32 %v1406, 0.0
      %v1711 = vmax.f32 %v1411, 0.0
      %v1712 = vmax.f32 %v1414, 0.0
      %v1713 = vmax.f32 %v1419, 0.0
      %v1714 = vmax.f32 %v1422, 0.0
      %v1715 = vmax.f32 %v1427, 0.0
      %v1716 = vmax.f32 %v1430, 0.0
      %v1717 = vmax.f32 %v1435, 0.0
      %v1718 = vmax.f32 %v1438, 0.0
      %v1719 = vmax.f32 %v1443, 0.0
      %v1720 = vmax.f32 %v1446, 0.0
      %v1721 = vmax.f32 %v1451, 0.0
      %v1722 = vmax.f32 %v1454, 0.0
      %v1723 = vmax.f32 %v1459, 0.0
      %v1724 = vmax.f32 %v1462, 0.0
      %v1725 = vmax.f32 %v1467, 0.0
      %v1726 = vmax.f32 %v1470, 0.0
      %v1727 = vmax.f32 %v1475, 0.0
      %v1728 = vmax.f32 %v1478, 0.0
      %v1729 = vmax.f32 %v1483, 0.0
      %v1730 = vmax.f32 %v1486, 0.0
      %v1731 = vmax.f32 %v1491, 0.0
      %v1732 = vmax.f32 %v1494, 0.0
      %v1733 = vmax.f32 %v1499, 0.0
      %v1734 = vmax.f32 %v1502, 0.0
      %v1735 = vmax.f32 %v1507, 0.0
      %v1736 = vmax.f32 %v1510, 0.0
      %v1737 = vmax.f32 %v1515, 0.0
      %v1738 = vmax.f32 %v1518, 0.0
      %v1739 = vmax.f32 %v1523, 0.0
      %v1740 = vmax.f32 %v1526, 0.0
      %v1741 = vmax.f32 %v1531, 0.0
      %v1742 = vmax.f32 %v1534, 0.0
      %v1743 = vmax.f32 %v1539, 0.0
      %v1744 = vmax.f32 %v1542, 0.0
      %v1745 = vmax.f32 %v1547, 0.0
      %v1746 = vmax.f32 %v1550, 0.0
      %v1747 = vmax.f32 %v1555, 0.0
      %v1748 = vmax.f32 %v1558, 0.0
      %v1749 = vmax.f32 %v1563, 0.0
      %v1750 = vmax.f32 %v1566, 0.0
      %v1751 = vmax.f32 %v1571, 0.0
      %v1752 = vmax.f32 %v1574, 0.0
      %v1753 = vmax.f32 %v1579, 0.0
      %v1754 = vmax.f32 %v1582, 0.0
      %v1755 = vmax.f32 %v1587, 0.0
      %v1756 = vmax.f32 %v1590, 0.0
      %v1757 = vmax.f32 %v1595, 0.0
      %v1758 = vmax.f32 %v1598, 0.0
      %v1759 = vmax.f32 %v1603, 0.0
      %v1760 = vmax.f32 %v1606, 0.0
      %v1761 = vmax.f32 %v1611, 0.0
      %v1762 = vmax.f32 %v1614, 0.0
      %v1763 = vmax.f32 %v1619, 0.0
      %v1764 = vmax.f32 %v1622, 0.0
      %v1765 = vmax.f32 %v1627, 0.0
      %v1766 = vmax.f32 %v1630, 0.0
      %v1767 = vmax.f32 %v1635, 0.0
      %v1768 = vmax.f32 %v1638, 0.0
      %v1769 = vpack.c.bf16 %v1642, %v1641
      %v1770 = vpack.c.bf16 %v1644, %v1643
      %v1771 = vpack.c.bf16 %v1646, %v1645
      %v1772 = vpack.c.bf16 %v1648, %v1647
      %v1773 = vpack.c.bf16 %v1650, %v1649
      %v1774 = vpack.c.bf16 %v1652, %v1651
      %v1775 = vpack.c.bf16 %v1654, %v1653
      %v1776 = vpack.c.bf16 %v1656, %v1655
      %v1777 = vpack.c.bf16 %v1658, %v1657
      %v1778 = vpack.c.bf16 %v1660, %v1659
      %v1779 = vpack.c.bf16 %v1662, %v1661
      %v1780 = vpack.c.bf16 %v1664, %v1663
      %v1781 = vpack.c.bf16 %v1666, %v1665
      %v1782 = vpack.c.bf16 %v1668, %v1667
      %v1783 = vpack.c.bf16 %v1670, %v1669
      %v1784 = vpack.c.bf16 %v1672, %v1671
      %v1785 = vpack.c.bf16 %v1674, %v1673
      %v1786 = vpack.c.bf16 %v1676, %v1675
      %v1787 = vpack.c.bf16 %v1678, %v1677
      %v1788 = vpack.c.bf16 %v1680, %v1679
      %v1789 = vpack.c.bf16 %v1682, %v1681
      %v1790 = vpack.c.bf16 %v1684, %v1683
      %v1791 = vpack.c.bf16 %v1686, %v1685
      %v1792 = vpack.c.bf16 %v1688, %v1687
      %v1793 = vpack.c.bf16 %v1690, %v1689
      %v1794 = vpack.c.bf16 %v1692, %v1691
      %v1795 = vpack.c.bf16 %v1694, %v1693
      %v1796 = vpack.c.bf16 %v1696, %v1695
      %v1797 = vpack.c.bf16 %v1698, %v1697
      %v1798 = vpack.c.bf16 %v1700, %v1699
      %v1799 = vpack.c.bf16 %v1702, %v1701
      %v1800 = vpack.c.bf16 %v1704, %v1703
      %v1801 = vpack.c.bf16 %v1706, %v1705
      %v1802 = vpack.c.bf16 %v1708, %v1707
      %v1803 = vpack.c.bf16 %v1710, %v1709
      %v1804 = vpack.c.bf16 %v1712, %v1711
      %v1805 = vpack.c.bf16 %v1714, %v1713
      %v1806 = vpack.c.bf16 %v1716, %v1715
      %v1807 = vpack.c.bf16 %v1718, %v1717
      %v1808 = vpack.c.bf16 %v1720, %v1719
      %v1809 = vpack.c.bf16 %v1722, %v1721
      %v1810 = vpack.c.bf16 %v1724, %v1723
      %v1811 = vpack.c.bf16 %v1726, %v1725
      %v1812 = vpack.c.bf16 %v1728, %v1727
      %v1813 = vpack.c.bf16 %v1730, %v1729
      %v1814 = vpack.c.bf16 %v1732, %v1731
      %v1815 = vpack.c.bf16 %v1734, %v1733
      %v1816 = vpack.c.bf16 %v1736, %v1735
      %v1817 = vpack.c.bf16 %v1738, %v1737
      %v1818 = vpack.c.bf16 %v1740, %v1739
      %v1819 = vpack.c.bf16 %v1742, %v1741
      %v1820 = vpack.c.bf16 %v1744, %v1743
      %v1821 = vpack.c.bf16 %v1746, %v1745
      %v1822 = vpack.c.bf16 %v1748, %v1747
      %v1823 = vpack.c.bf16 %v1750, %v1749
      %v1824 = vpack.c.bf16 %v1752, %v1751
      %v1825 = vpack.c.bf16 %v1754, %v1753
      %v1826 = vpack.c.bf16 %v1756, %v1755
      %v1827 = vpack.c.bf16 %v1758, %v1757
      %v1828 = vpack.c.bf16 %v1760, %v1759
      %v1829 = vpack.c.bf16 %v1762, %v1761
      %v1830 = vpack.c.bf16 %v1764, %v1763
      %v1831 = vpack.c.bf16 %v1766, %v1765
      %v1832 = vpack.c.bf16 %v1768, %v1767
      %v1833 = vunpack.c.l.bf16 %v1769
      %v1834 = vunpack.c.h.bf16 %v1769
      %v1835 = vunpack.c.l.bf16 %v1770
      %v1836 = vunpack.c.h.bf16 %v1770
      %v1837 = vunpack.c.l.bf16 %v1771
      %v1838 = vunpack.c.h.bf16 %v1771
      %v1839 = vunpack.c.l.bf16 %v1772
      %v1840 = vunpack.c.h.bf16 %v1772
      %v1841 = vunpack.c.l.bf16 %v1773
      %v1842 = vunpack.c.h.bf16 %v1773
      %v1843 = vunpack.c.l.bf16 %v1774
      %v1844 = vunpack.c.h.bf16 %v1774
      %v1845 = vunpack.c.l.bf16 %v1775
      %v1846 = vunpack.c.h.bf16 %v1775
      %v1847 = vunpack.c.l.bf16 %v1776
      %v1848 = vunpack.c.h.bf16 %v1776
      %v1849 = vunpack.c.l.bf16 %v1777
      %v1850 = vunpack.c.h.bf16 %v1777
      %v1851 = vunpack.c.l.bf16 %v1778
      %v1852 = vunpack.c.h.bf16 %v1778
      %v1853 = vunpack.c.l.bf16 %v1779
      %v1854 = vunpack.c.h.bf16 %v1779
      %v1855 = vunpack.c.l.bf16 %v1780
      %v1856 = vunpack.c.h.bf16 %v1780
      %v1857 = vunpack.c.l.bf16 %v1781
      %v1858 = vunpack.c.h.bf16 %v1781
      %v1859 = vunpack.c.l.bf16 %v1782
      %v1860 = vunpack.c.h.bf16 %v1782
      %v1861 = vunpack.c.l.bf16 %v1783
      %v1862 = vunpack.c.h.bf16 %v1783
      %v1863 = vunpack.c.l.bf16 %v1784
      %v1864 = vunpack.c.h.bf16 %v1784
      %v1865 = vunpack.c.l.bf16 %v1785
      %v1866 = vunpack.c.h.bf16 %v1785
      %v1867 = vunpack.c.l.bf16 %v1786
      %v1868 = vunpack.c.h.bf16 %v1786
      %v1869 = vunpack.c.l.bf16 %v1787
      %v1870 = vunpack.c.h.bf16 %v1787
      %v1871 = vunpack.c.l.bf16 %v1788
      %v1872 = vunpack.c.h.bf16 %v1788
      %v1873 = vunpack.c.l.bf16 %v1789
      %v1874 = vunpack.c.h.bf16 %v1789
      %v1875 = vunpack.c.l.bf16 %v1790
      %v1876 = vunpack.c.h.bf16 %v1790
      %v1877 = vunpack.c.l.bf16 %v1791
      %v1878 = vunpack.c.h.bf16 %v1791
      %v1879 = vunpack.c.l.bf16 %v1792
      %v1880 = vunpack.c.h.bf16 %v1792
      %v1881 = vunpack.c.l.bf16 %v1793
      %v1882 = vunpack.c.h.bf16 %v1793
      %v1883 = vunpack.c.l.bf16 %v1794
      %v1884 = vunpack.c.h.bf16 %v1794
      %v1885 = vunpack.c.l.bf16 %v1795
      %v1886 = vunpack.c.h.bf16 %v1795
      %v1887 = vunpack.c.l.bf16 %v1796
      %v1888 = vunpack.c.h.bf16 %v1796
      %v1889 = vunpack.c.l.bf16 %v1797
      %v1890 = vunpack.c.h.bf16 %v1797
      %v1891 = vunpack.c.l.bf16 %v1798
      %v1892 = vunpack.c.h.bf16 %v1798
      %v1893 = vunpack.c.l.bf16 %v1799
      %v1894 = vunpack.c.h.bf16 %v1799
      %v1895 = vunpack.c.l.bf16 %v1800
      %v1896 = vunpack.c.h.bf16 %v1800
      %v1897 = vunpack.c.l.bf16 %v1801
      %v1898 = vunpack.c.h.bf16 %v1801
      %v1899 = vunpack.c.l.bf16 %v1802
      %v1900 = vunpack.c.h.bf16 %v1802
      %v1901 = vunpack.c.l.bf16 %v1803
      %v1902 = vunpack.c.h.bf16 %v1803
      %v1903 = vunpack.c.l.bf16 %v1804
      %v1904 = vunpack.c.h.bf16 %v1804
      %v1905 = vunpack.c.l.bf16 %v1805
      %v1906 = vunpack.c.h.bf16 %v1805
      %v1907 = vunpack.c.l.bf16 %v1806
      %v1908 = vunpack.c.h.bf16 %v1806
      %v1909 = vunpack.c.l.bf16 %v1807
      %v1910 = vunpack.c.h.bf16 %v1807
      %v1911 = vunpack.c.l.bf16 %v1808
      %v1912 = vunpack.c.h.bf16 %v1808
      %v1913 = vunpack.c.l.bf16 %v1809
      %v1914 = vunpack.c.h.bf16 %v1809
      %v1915 = vunpack.c.l.bf16 %v1810
      %v1916 = vunpack.c.h.bf16 %v1810
      %v1917 = vunpack.c.l.bf16 %v1811
      %v1918 = vunpack.c.h.bf16 %v1811
      %v1919 = vunpack.c.l.bf16 %v1812
      %v1920 = vunpack.c.h.bf16 %v1812
      %v1921 = vunpack.c.l.bf16 %v1813
      %v1922 = vunpack.c.h.bf16 %v1813
      %v1923 = vunpack.c.l.bf16 %v1814
      %v1924 = vunpack.c.h.bf16 %v1814
      %v1925 = vunpack.c.l.bf16 %v1815
      %v1926 = vunpack.c.h.bf16 %v1815
      %v1927 = vunpack.c.l.bf16 %v1816
      %v1928 = vunpack.c.h.bf16 %v1816
      %v1929 = vunpack.c.l.bf16 %v1817
      %v1930 = vunpack.c.h.bf16 %v1817
      %v1931 = vunpack.c.l.bf16 %v1818
      %v1932 = vunpack.c.h.bf16 %v1818
      %v1933 = vunpack.c.l.bf16 %v1819
      %v1934 = vunpack.c.h.bf16 %v1819
      %v1935 = vunpack.c.l.bf16 %v1820
      %v1936 = vunpack.c.h.bf16 %v1820
      %v1937 = vunpack.c.l.bf16 %v1821
      %v1938 = vunpack.c.h.bf16 %v1821
      %v1939 = vunpack.c.l.bf16 %v1822
      %v1940 = vunpack.c.h.bf16 %v1822
      %v1941 = vunpack.c.l.bf16 %v1823
      %v1942 = vunpack.c.h.bf16 %v1823
      %v1943 = vunpack.c.l.bf16 %v1824
      %v1944 = vunpack.c.h.bf16 %v1824
      %v1945 = vunpack.c.l.bf16 %v1825
      %v1946 = vunpack.c.h.bf16 %v1825
      %v1947 = vunpack.c.l.bf16 %v1826
      %v1948 = vunpack.c.h.bf16 %v1826
      %v1949 = vunpack.c.l.bf16 %v1827
      %v1950 = vunpack.c.h.bf16 %v1827
      %v1951 = vunpack.c.l.bf16 %v1828
      %v1952 = vunpack.c.h.bf16 %v1828
      %v1953 = vunpack.c.l.bf16 %v1829
      %v1954 = vunpack.c.h.bf16 %v1829
      %v1955 = vunpack.c.l.bf16 %v1830
      %v1956 = vunpack.c.h.bf16 %v1830
      %v1957 = vunpack.c.l.bf16 %v1831
      %v1958 = vunpack.c.h.bf16 %v1831
      %v1959 = vunpack.c.l.bf16 %v1832
      %v1960 = vunpack.c.h.bf16 %v1832
      %v1961 = vadd.f32 %v1833, %v1834
      %v1962 = vadd.f32 %v1961, %v1835
      %v1963 = vadd.f32 %v1962, %v1836
      %v1964 = vadd.f32 %v1963, %v1837
      %v1965 = vadd.f32 %v1964, %v1838
      %v1966 = vadd.f32 %v1965, %v1839
      %v1967 = vadd.f32 %v1966, %v1840
      %v1968 = vrot.slane %v1967, 4
      %v1969 = vadd.f32 %v1967, %v1968
      %v1970 = vrot.slane %v1969, 2
      %v1971 = vadd.f32 %v1969, %v1970
      %v1972 = vrot.slane %v1971, 1
      %v1973 = vadd.f32 %v1971, %v1972
      %v1974 = vadd.f32 %v1841, %v1842
      %v1975 = vadd.f32 %v1974, %v1843
      %v1976 = vadd.f32 %v1975, %v1844
      %v1977 = vadd.f32 %v1976, %v1845
      %v1978 = vadd.f32 %v1977, %v1846
      %v1979 = vadd.f32 %v1978, %v1847
      %v1980 = vadd.f32 %v1979, %v1848
      %v1981 = vrot.slane %v1980, 4
      %v1982 = vadd.f32 %v1980, %v1981
      %v1983 = vrot.slane %v1982, 2
      %v1984 = vadd.f32 %v1982, %v1983
      %v1985 = vrot.slane %v1984, 1
      %v1986 = vadd.f32 %v1984, %v1985
      %v1987 = vadd.f32 %v1849, %v1850
      %v1988 = vadd.f32 %v1987, %v1851
      %v1989 = vadd.f32 %v1988, %v1852
      %v1990 = vadd.f32 %v1989, %v1853
      %v1991 = vadd.f32 %v1990, %v1854
      %v1992 = vadd.f32 %v1991, %v1855
      %v1993 = vadd.f32 %v1992, %v1856
      %v1994 = vrot.slane %v1993, 4
      %v1995 = vadd.f32 %v1993, %v1994
      %v1996 = vrot.slane %v1995, 2
      %v1997 = vadd.f32 %v1995, %v1996
      %v1998 = vrot.slane %v1997, 1
      %v1999 = vadd.f32 %v1997, %v1998
      %v2000 = vadd.f32 %v1857, %v1858
      %v2001 = vadd.f32 %v2000, %v1859
      %v2002 = vadd.f32 %v2001, %v1860
      %v2003 = vadd.f32 %v2002, %v1861
      %v2004 = vadd.f32 %v2003, %v1862
      %v2005 = vadd.f32 %v2004, %v1863
      %v2006 = vadd.f32 %v2005, %v1864
      %v2007 = vrot.slane %v2006, 4
      %v2008 = vadd.f32 %v2006, %v2007
      %v2009 = vrot.slane %v2008, 2
      %v2010 = vadd.f32 %v2008, %v2009
      %v2011 = vrot.slane %v2010, 1
      %v2012 = vadd.f32 %v2010, %v2011
      %v2013 = vadd.f32 %v1865, %v1866
      %v2014 = vadd.f32 %v2013, %v1867
      %v2015 = vadd.f32 %v2014, %v1868
      %v2016 = vadd.f32 %v2015, %v1869
      %v2017 = vadd.f32 %v2016, %v1870
      %v2018 = vadd.f32 %v2017, %v1871
      %v2019 = vadd.f32 %v2018, %v1872
      %v2020 = vrot.slane %v2019, 4
      %v2021 = vadd.f32 %v2019, %v2020
      %v2022 = vrot.slane %v2021, 2
      %v2023 = vadd.f32 %v2021, %v2022
      %v2024 = vrot.slane %v2023, 1
      %v2025 = vadd.f32 %v2023, %v2024
      %v2026 = vadd.f32 %v1873, %v1874
      %v2027 = vadd.f32 %v2026, %v1875
      %v2028 = vadd.f32 %v2027, %v1876
      %v2029 = vadd.f32 %v2028, %v1877
      %v2030 = vadd.f32 %v2029, %v1878
      %v2031 = vadd.f32 %v2030, %v1879
      %v2032 = vadd.f32 %v2031, %v1880
      %v2033 = vrot.slane %v2032, 4
      %v2034 = vadd.f32 %v2032, %v2033
      %v2035 = vrot.slane %v2034, 2
      %v2036 = vadd.f32 %v2034, %v2035
      %v2037 = vrot.slane %v2036, 1
      %v2038 = vadd.f32 %v2036, %v2037
      %v2039 = vadd.f32 %v1881, %v1882
      %v2040 = vadd.f32 %v2039, %v1883
      %v2041 = vadd.f32 %v2040, %v1884
      %v2042 = vadd.f32 %v2041, %v1885
      %v2043 = vadd.f32 %v2042, %v1886
      %v2044 = vadd.f32 %v2043, %v1887
      %v2045 = vadd.f32 %v2044, %v1888
      %v2046 = vrot.slane %v2045, 4
      %v2047 = vadd.f32 %v2045, %v2046
      %v2048 = vrot.slane %v2047, 2
      %v2049 = vadd.f32 %v2047, %v2048
      %v2050 = vrot.slane %v2049, 1
      %v2051 = vadd.f32 %v2049, %v2050
      %v2052 = vadd.f32 %v1889, %v1890
      %v2053 = vadd.f32 %v2052, %v1891
      %v2054 = vadd.f32 %v2053, %v1892
      %v2055 = vadd.f32 %v2054, %v1893
      %v2056 = vadd.f32 %v2055, %v1894
      %v2057 = vadd.f32 %v2056, %v1895
      %v2058 = vadd.f32 %v2057, %v1896
      %v2059 = vrot.slane %v2058, 4
      %v2060 = vadd.f32 %v2058, %v2059
      %v2061 = vrot.slane %v2060, 2
      %v2062 = vadd.f32 %v2060, %v2061
      %v2063 = vrot.slane %v2062, 1
      %v2064 = vadd.f32 %v2062, %v2063
      %v2065 = vadd.f32 %v1897, %v1898
      %v2066 = vadd.f32 %v2065, %v1899
      %v2067 = vadd.f32 %v2066, %v1900
      %v2068 = vadd.f32 %v2067, %v1901
      %v2069 = vadd.f32 %v2068, %v1902
      %v2070 = vadd.f32 %v2069, %v1903
      %v2071 = vadd.f32 %v2070, %v1904
      %v2072 = vrot.slane %v2071, 4
      %v2073 = vadd.f32 %v2071, %v2072
      %v2074 = vrot.slane %v2073, 2
      %v2075 = vadd.f32 %v2073, %v2074
      %v2076 = vrot.slane %v2075, 1
      %v2077 = vadd.f32 %v2075, %v2076
      %v2078 = vadd.f32 %v1905, %v1906
      %v2079 = vadd.f32 %v2078, %v1907
      %v2080 = vadd.f32 %v2079, %v1908
      %v2081 = vadd.f32 %v2080, %v1909
      %v2082 = vadd.f32 %v2081, %v1910
      %v2083 = vadd.f32 %v2082, %v1911
      %v2084 = vadd.f32 %v2083, %v1912
      %v2085 = vrot.slane %v2084, 4
      %v2086 = vadd.f32 %v2084, %v2085
      %v2087 = vrot.slane %v2086, 2
      %v2088 = vadd.f32 %v2086, %v2087
      %v2089 = vrot.slane %v2088, 1
      %v2090 = vadd.f32 %v2088, %v2089
      %v2091 = vadd.f32 %v1913, %v1914
      %v2092 = vadd.f32 %v2091, %v1915
      %v2093 = vadd.f32 %v2092, %v1916
      %v2094 = vadd.f32 %v2093, %v1917
      %v2095 = vadd.f32 %v2094, %v1918
      %v2096 = vadd.f32 %v2095, %v1919
      %v2097 = vadd.f32 %v2096, %v1920
      %v2098 = vrot.slane %v2097, 4
      %v2099 = vadd.f32 %v2097, %v2098
      %v2100 = vrot.slane %v2099, 2
      %v2101 = vadd.f32 %v2099, %v2100
      %v2102 = vrot.slane %v2101, 1
      %v2103 = vadd.f32 %v2101, %v2102
      %v2104 = vadd.f32 %v1921, %v1922
      %v2105 = vadd.f32 %v2104, %v1923
      %v2106 = vadd.f32 %v2105, %v1924
      %v2107 = vadd.f32 %v2106, %v1925
      %v2108 = vadd.f32 %v2107, %v1926
      %v2109 = vadd.f32 %v2108, %v1927
      %v2110 = vadd.f32 %v2109, %v1928
      %v2111 = vrot.slane %v2110, 4
      %v2112 = vadd.f32 %v2110, %v2111
      %v2113 = vrot.slane %v2112, 2
      %v2114 = vadd.f32 %v2112, %v2113
      %v2115 = vrot.slane %v2114, 1
      %v2116 = vadd.f32 %v2114, %v2115
      %v2117 = vadd.f32 %v1929, %v1930
      %v2118 = vadd.f32 %v2117, %v1931
      %v2119 = vadd.f32 %v2118, %v1932
      %v2120 = vadd.f32 %v2119, %v1933
      %v2121 = vadd.f32 %v2120, %v1934
      %v2122 = vadd.f32 %v2121, %v1935
      %v2123 = vadd.f32 %v2122, %v1936
      %v2124 = vrot.slane %v2123, 4
      %v2125 = vadd.f32 %v2123, %v2124
      %v2126 = vrot.slane %v2125, 2
      %v2127 = vadd.f32 %v2125, %v2126
      %v2128 = vrot.slane %v2127, 1
      %v2129 = vadd.f32 %v2127, %v2128
      %v2130 = vadd.f32 %v1937, %v1938
      %v2131 = vadd.f32 %v2130, %v1939
      %v2132 = vadd.f32 %v2131, %v1940
      %v2133 = vadd.f32 %v2132, %v1941
      %v2134 = vadd.f32 %v2133, %v1942
      %v2135 = vadd.f32 %v2134, %v1943
      %v2136 = vadd.f32 %v2135, %v1944
      %v2137 = vrot.slane %v2136, 4
      %v2138 = vadd.f32 %v2136, %v2137
      %v2139 = vrot.slane %v2138, 2
      %v2140 = vadd.f32 %v2138, %v2139
      %v2141 = vrot.slane %v2140, 1
      %v2142 = vadd.f32 %v2140, %v2141
      %v2143 = vadd.f32 %v1945, %v1946
      %v2144 = vadd.f32 %v2143, %v1947
      %v2145 = vadd.f32 %v2144, %v1948
      %v2146 = vadd.f32 %v2145, %v1949
      %v2147 = vadd.f32 %v2146, %v1950
      %v2148 = vadd.f32 %v2147, %v1951
      %v2149 = vadd.f32 %v2148, %v1952
      %v2150 = vrot.slane %v2149, 4
      %v2151 = vadd.f32 %v2149, %v2150
      %v2152 = vrot.slane %v2151, 2
      %v2153 = vadd.f32 %v2151, %v2152
      %v2154 = vrot.slane %v2153, 1
      %v2155 = vadd.f32 %v2153, %v2154
      %v2156 = vadd.f32 %v1953, %v1954
      %v2157 = vadd.f32 %v2156, %v1955
      %v2158 = vadd.f32 %v2157, %v1956
      %v2159 = vadd.f32 %v2158, %v1957
      %v2160 = vadd.f32 %v2159, %v1958
      %v2161 = vadd.f32 %v2160, %v1959
      %v2162 = vadd.f32 %v2161, %v1960
      %v2163 = vrot.slane %v2162, 4
      %v2164 = vadd.f32 %v2162, %v2163
      %v2165 = vrot.slane %v2164, 2
      %v2166 = vadd.f32 %v2164, %v2165
      %v2167 = vrot.slane %v2166, 1
      %v2168 = vadd.f32 %v2166, %v2167
      %v2169 = vmul.f32 %v1973, 0.015625
      %v2170 = vmul.f32 %v1986, 0.015625
      %v2171 = vmul.f32 %v1999, 0.015625
      %v2172 = vmul.f32 %v2012, 0.015625
      %v2173 = vmul.f32 %v2025, 0.015625
      %v2174 = vmul.f32 %v2038, 0.015625
      %v2175 = vmul.f32 %v2051, 0.015625
      %v2176 = vmul.f32 %v2064, 0.015625
      %v2177 = vmul.f32 %v2077, 0.015625
      %v2178 = vmul.f32 %v2090, 0.015625
      %v2179 = vmul.f32 %v2103, 0.015625
      %v2180 = vmul.f32 %v2116, 0.015625
      %v2181 = vmul.f32 %v2129, 0.015625
      %v2182 = vmul.f32 %v2142, 0.015625
      %v2183 = vmul.f32 %v2155, 0.015625
      %v2184 = vmul.f32 %v2168, 0.015625
      %v2185 = vpack.c.bf16 %v2169, %v2169
      %v2186 = vpack.c.bf16 %v2170, %v2170
      %v2187 = vpack.c.bf16 %v2171, %v2171
      %v2188 = vpack.c.bf16 %v2172, %v2172
      %v2189 = vpack.c.bf16 %v2173, %v2173
      %v2190 = vpack.c.bf16 %v2174, %v2174
      %v2191 = vpack.c.bf16 %v2175, %v2175
      %v2192 = vpack.c.bf16 %v2176, %v2176
      %v2193 = vpack.c.bf16 %v2177, %v2177
      %v2194 = vpack.c.bf16 %v2178, %v2178
      %v2195 = vpack.c.bf16 %v2179, %v2179
      %v2196 = vpack.c.bf16 %v2180, %v2180
      %v2197 = vpack.c.bf16 %v2181, %v2181
      %v2198 = vpack.c.bf16 %v2182, %v2182
      %v2199 = vpack.c.bf16 %v2183, %v2183
      %v2200 = vpack.c.bf16 %v2184, %v2184
      %v2201 = vld [vmem:[%s401] sm:$0xf]
      %v2202 = vld [vmem:[%s401 + $0x4] sm:$0xf]
      %v2203 = vld [vmem:[%s401 + $0x8] sm:$0xf]
      %v2204 = vld [vmem:[%s401 + $0xc] sm:$0xf]
      %v2205 = vld [vmem:[%s401 + $0x10] sm:$0xf]
      %v2206 = vld [vmem:[%s401 + $0x14] sm:$0xf]
      %v2207 = vld [vmem:[%s401 + $0x18] sm:$0xf]
      %v2208 = vld [vmem:[%s401 + $0x1c] sm:$0xf]
      %v2209 = vld [vmem:[%s401 + $0x20] sm:$0xf]
      %v2210 = vld [vmem:[%s401 + $0x24] sm:$0xf]
      %v2211 = vld [vmem:[%s401 + $0x28] sm:$0xf]
      %v2212 = vld [vmem:[%s401 + $0x2c] sm:$0xf]
      %v2213 = vld [vmem:[%s401 + $0x30] sm:$0xf]
      %v2214 = vld [vmem:[%s401 + $0x34] sm:$0xf]
      %v2215 = vld [vmem:[%s401 + $0x38] sm:$0xf]
      %v2216 = vld [vmem:[%s401 + $0x3c] sm:$0xf]
      %v2217 = vld [vmem:[%s404] sm:$0x1]
      %v2219 = vlaneseq
      %v2220 = vshrl.u32 %v2219, 7
      %v2221 = vsub.s32 0, %v2220
      %v2222 = vrot.slane %v2217, %v2221
      %v2240 = vunpack.c.l.b16 %v2185
      %v2241 = vunpack.c.l.b16 %v2186
      %v2242 = vunpack.c.l.b16 %v2187
      %v2243 = vunpack.c.l.b16 %v2188
      %v2244 = vunpack.c.l.b16 %v2189
      %v2245 = vunpack.c.l.b16 %v2190
      %v2246 = vunpack.c.l.b16 %v2191
      %v2247 = vunpack.c.l.b16 %v2192
      %v2248 = vunpack.c.l.b16 %v2193
      %v2249 = vunpack.c.l.b16 %v2194
      %v2250 = vunpack.c.l.b16 %v2195
      %v2251 = vunpack.c.l.b16 %v2196
      %v2252 = vunpack.c.l.b16 %v2197
      %v2253 = vunpack.c.l.b16 %v2198
      %v2254 = vunpack.c.l.b16 %v2199
      %v2255 = vunpack.c.l.b16 %v2200
      %vm2256 = vcmask 1041409
      %v2257 = vsel %vm2256, %v2241, %v2240
      %vm2258 = vcmask 1042434
      %v2259 = vsel %vm2258, %v2242, %v2257
      %vm2260 = vcmask 1043459
      %v2261 = vsel %vm2260, %v2243, %v2259
      %vm2262 = vcmask 1044484
      %v2263 = vsel %vm2262, %v2244, %v2261
      %vm2264 = vcmask 1045509
      %v2265 = vsel %vm2264, %v2245, %v2263
      %vm2266 = vcmask 1046534
      %v2267 = vsel %vm2266, %v2246, %v2265
      %vm2268 = vcmask 1047559
      %v2269 = vsel %vm2268, %v2247, %v2267
      %v2270 = vsel %vm2256, %v2249, %v2248
      %v2271 = vsel %vm2258, %v2250, %v2270
      %v2272 = vsel %vm2260, %v2251, %v2271
      %v2273 = vsel %vm2262, %v2252, %v2272
      %v2274 = vsel %vm2264, %v2253, %v2273
      %v2275 = vsel %vm2266, %v2254, %v2274
      %v2276 = vsel %vm2268, %v2255, %v2275
      %v2277 = vpack.c.b16 %v2276, %v2269
      %v2295 = vunpack.c.l.b16 %v2201
      %v2296 = vunpack.c.l.b16 %v2202
      %v2297 = vunpack.c.l.b16 %v2203
      %v2298 = vunpack.c.l.b16 %v2204
      %v2299 = vunpack.c.l.b16 %v2205
      %v2300 = vunpack.c.l.b16 %v2206
      %v2301 = vunpack.c.l.b16 %v2207
      %v2302 = vunpack.c.l.b16 %v2208
      %v2303 = vunpack.c.l.b16 %v2209
      %v2304 = vunpack.c.l.b16 %v2210
      %v2305 = vunpack.c.l.b16 %v2211
      %v2306 = vunpack.c.l.b16 %v2212
      %v2307 = vunpack.c.l.b16 %v2213
      %v2308 = vunpack.c.l.b16 %v2214
      %v2309 = vunpack.c.l.b16 %v2215
      %v2310 = vunpack.c.l.b16 %v2216
      %v2311 = vpack.c.b16 %v2296, %v2295
      %v2312 = vpack.c.b16 %v2298, %v2297
      %v2313 = vpack.c.b16 %v2300, %v2299
      %v2314 = vpack.c.b16 %v2302, %v2301
      %v2315 = vpack.c.b16 %v2304, %v2303
      %v2316 = vpack.c.b16 %v2306, %v2305
      %v2317 = vpack.c.b16 %v2308, %v2307
      %v2318 = vpack.c.b16 %v2310, %v2309
      %2327 = vmatprep.subr.bf16.mxu0 0
      %2328 = vmatpush1.bf16.msra.mxu0 %v2318
      %2329 = vmatprep.subr.bf16.mxu0 0
      %2330 = vmatpush1.bf16.msra.mxu0 %v2317
      %2331 = vmatprep.subr.bf16.mxu0 0
      %2332 = vmatpush1.bf16.msra.mxu0 %v2316
      %2333 = vmatprep.subr.bf16.mxu0 0
      %2334 = vmatpush1.bf16.msra.mxu0 %v2315
      %2335 = vmatprep.subr.bf16.mxu0 0
      %2336 = vmatpush1.bf16.msra.mxu0 %v2314
      %2337 = vmatprep.subr.bf16.mxu0 0
      %2338 = vmatpush1.bf16.msra.mxu0 %v2313
      %2339 = vmatprep.subr.bf16.mxu0 0
      %2340 = vmatpush1.bf16.msra.mxu0 %v2312
      %2341 = vmatprep.subr.bf16.mxu0 0
      %2342 = vmatpush1.bf16.msra.mxu0 %v2311
      %2343 = vmatprep.subr.bf16.mxu0 0
      %2344 = vmatpush2.bf16.msra.mxu0 0
      %2345 = vmatprep.subr.bf16.mxu0 0
      %2346 = vmatpush2.bf16.msra.mxu0 0
      %2347 = vmatprep.subr.bf16.mxu0 0
      %2348 = vmatpush2.bf16.msra.mxu0 0
      %2349 = vmatprep.subr.bf16.mxu0 0
      %2350 = vmatpush2.bf16.msra.mxu0 0
      %2351 = vmatprep.subr.bf16.mxu0 0
      %2352 = vmatpush2.bf16.msra.mxu0 0
      %2353 = vmatprep.subr.bf16.mxu0 0
      %2354 = vmatpush2.bf16.msra.mxu0 0
      %2355 = vmatprep.subr.bf16.mxu0 0
      %2356 = vmatpush2.bf16.msra.mxu0 0
      %2357 = vmatprep.subr.bf16.mxu0 0
      %2358 = vmatpush2.bf16.msra.mxu0 0
      %2359 = vmatprep.mubr.bf16.mxu0 0
      %2360 = vmatmul.mubr.bf16.gmra.mxu0 %v2277
      %v2361 = vpop.f32.mrf.mxu0
      %v2362 = vadd.f32 %v2222, %v2361
      %v2363 = vpop.f32.mrf.mxu0
      %v2364 = vpop.f32.mrf.mxu0
      %v2365 = vadd.f32 %v2222, %v2364
      %v2366 = vpop.f32.mrf.mxu0
      %2367 = vdwg.mxu0
      %v2368 = vmax.f32 %v2362, 0.0
      %v2369 = vmax.f32 %v2365, 0.0
      %v2370 = vpack.c.bf16 %v2369, %v2368
      %v2371 = vld [vmem:[%s409] sm:$0xf]
      %v2372 = vld [vmem:[%s409 + $0x4] sm:$0xf]
      %v2373 = vld [vmem:[%s409 + $0x8] sm:$0xf]
      %v2374 = vld [vmem:[%s409 + $0xc] sm:$0xf]
      %v2375 = vld [vmem:[%s409 + $0x10] sm:$0xf]
      %v2376 = vld [vmem:[%s409 + $0x14] sm:$0xf]
      %v2377 = vld [vmem:[%s409 + $0x18] sm:$0xf]
      %v2378 = vld [vmem:[%s409 + $0x1c] sm:$0xf]
      %v2379 = vld [vmem:[%s409 + $0x20] sm:$0xf]
      %v2380 = vld [vmem:[%s409 + $0x24] sm:$0xf]
      %v2381 = vld [vmem:[%s409 + $0x28] sm:$0xf]
      %v2382 = vld [vmem:[%s409 + $0x2c] sm:$0xf]
      %v2383 = vld [vmem:[%s409 + $0x30] sm:$0xf]
      %v2384 = vld [vmem:[%s409 + $0x34] sm:$0xf]
      %v2385 = vld [vmem:[%s409 + $0x38] sm:$0xf]
      %v2386 = vld [vmem:[%s409 + $0x3c] sm:$0xf]
      %v2387 = vld [vmem:[%s412] sm:$0x1]
      %v2389 = vlaneseq
      %v2390 = vshrl.u32 %v2389, 7
      %v2391 = vsub.s32 0, %v2390
      %v2392 = vrot.slane %v2387, %v2391
      %v2410 = vunpack.c.l.b16 %v2371
      %v2411 = vunpack.c.l.b16 %v2372
      %v2412 = vunpack.c.l.b16 %v2373
      %v2413 = vunpack.c.l.b16 %v2374
      %v2414 = vunpack.c.l.b16 %v2375
      %v2415 = vunpack.c.l.b16 %v2376
      %v2416 = vunpack.c.l.b16 %v2377
      %v2417 = vunpack.c.l.b16 %v2378
      %v2418 = vunpack.c.l.b16 %v2379
      %v2419 = vunpack.c.l.b16 %v2380
      %v2420 = vunpack.c.l.b16 %v2381
      %v2421 = vunpack.c.l.b16 %v2382
      %v2422 = vunpack.c.l.b16 %v2383
      %v2423 = vunpack.c.l.b16 %v2384
      %v2424 = vunpack.c.l.b16 %v2385
      %v2425 = vunpack.c.l.b16 %v2386
      %v2426 = vpack.c.b16 %v2411, %v2410
      %v2427 = vpack.c.b16 %v2413, %v2412
      %v2428 = vpack.c.b16 %v2415, %v2414
      %v2429 = vpack.c.b16 %v2417, %v2416
      %v2430 = vpack.c.b16 %v2419, %v2418
      %v2431 = vpack.c.b16 %v2421, %v2420
      %v2432 = vpack.c.b16 %v2423, %v2422
      %v2433 = vpack.c.b16 %v2425, %v2424
      %2442 = vmatprep.subr.bf16.mxu0 0
      %2443 = vmatpush1.bf16.msra.mxu0 %v2433
      %2444 = vmatprep.subr.bf16.mxu0 0
      %2445 = vmatpush1.bf16.msra.mxu0 %v2432
      %2446 = vmatprep.subr.bf16.mxu0 0
      %2447 = vmatpush1.bf16.msra.mxu0 %v2431
      %2448 = vmatprep.subr.bf16.mxu0 0
      %2449 = vmatpush1.bf16.msra.mxu0 %v2430
      %2450 = vmatprep.subr.bf16.mxu0 0
      %2451 = vmatpush1.bf16.msra.mxu0 %v2429
      %2452 = vmatprep.subr.bf16.mxu0 0
      %2453 = vmatpush1.bf16.msra.mxu0 %v2428
      %2454 = vmatprep.subr.bf16.mxu0 0
      %2455 = vmatpush1.bf16.msra.mxu0 %v2427
      %2456 = vmatprep.subr.bf16.mxu0 0
      %2457 = vmatpush1.bf16.msra.mxu0 %v2426
      %2458 = vmatprep.subr.bf16.mxu0 0
      %2459 = vmatpush2.bf16.msra.mxu0 0
      %2460 = vmatprep.subr.bf16.mxu0 0
      %2461 = vmatpush2.bf16.msra.mxu0 0
      %2462 = vmatprep.subr.bf16.mxu0 0
      %2463 = vmatpush2.bf16.msra.mxu0 0
      %2464 = vmatprep.subr.bf16.mxu0 0
      %2465 = vmatpush2.bf16.msra.mxu0 0
      %2466 = vmatprep.subr.bf16.mxu0 0
      %2467 = vmatpush2.bf16.msra.mxu0 0
      %2468 = vmatprep.subr.bf16.mxu0 0
      %2469 = vmatpush2.bf16.msra.mxu0 0
      %2470 = vmatprep.subr.bf16.mxu0 0
      %2471 = vmatpush2.bf16.msra.mxu0 0
      %2472 = vmatprep.subr.bf16.mxu0 0
      %2473 = vmatpush2.bf16.msra.mxu0 0
      %2474 = vmatprep.mubr.bf16.mxu0 0
      %2475 = vmatmul.mubr.bf16.gmra.mxu0 %v2370
      %v2476 = vpop.f32.mrf.mxu0
      %v2477 = vadd.f32 %v2392, %v2476
      %v2478 = vpop.f32.mrf.mxu0
      %v2479 = vpop.f32.mrf.mxu0
      %v2480 = vadd.f32 %v2392, %v2479
      %v2481 = vpop.f32.mrf.mxu0
      %2482 = vdwg.mxu0
      %v2483 = vpack.c.bf16 %v2480, %v2477
      %v2485 = vunpack.c.l.b16 %v2483
      %v2486 = vunpack.c.h.b16 %v2483
      %v2487 = vpack.c.b16 %v2485, %v2485
      %v2488 = vpack.c.b16 %v2486, %v2486
      %2491 = vst [vmem:[%s421] sm:$0xf] %v2487
      %2492 = vst [vmem:[%s421 + $0x4] sm:$0xf] %v2488
      %s2493 = smul.u32 2, %s23
      %p2494 = scmp.lt.s32.totalorder %s22, 1
      %s2495 = scalar_select %p2494, %s22, 1
      %p2496 = scmp.lt.s32.totalorder %s2493, 1
      %s2497 = scalar_select %p2496, %s2493, 1
      %s2498 = smul.addr %s2495, 2
      %s2499 = sadd.s32 %s2497, %s2498
      %s2500 = smul.addr %s2499, 4
      %s2501 = scalar_lea.vmem %s7, %s2500
      // Predicated region
      $region49: #{simclr_multi_forward.1} parent=47 // pred_check
        %p2502 = pneg %p234
      $region50: #{simclr_multi_forward.1} parent=47 // pred_check_branch
        %2504 = sbr.rel (%p2502) target = $region52
      $region51: #{simclr_multi_forward.1} parent=47 // pred_region
        %s2505 = smul.u32 2, %s23
      $region52: #{simclr_multi_forward.1} parent=47 // pred_fallthru
        _
    $region48: #{simclr_multi_forward.1} parent=5 // pred_fallthru
      _
    %p2506 = scmp.le.s32.totalorder 2, %s13
    // Predicated region
    $region53: #{simclr_multi_forward.1} parent=5 // pred_check
      %p2507 = pneg %p2506
    $region54: #{simclr_multi_forward.1} parent=5 // pred_check_branch
      %2509 = sbr.rel (%p2507) target = $region56
    $region55: #{simclr_multi_forward.1} parent=5 // pred_region
      %s2510 = ssub.s32 %s13, 2
      // Predicated region
      $region57: #{simclr_multi_forward.1} parent=55 // pred_check
        %p2511 = pneg %p240
      $region58: #{simclr_multi_forward.1} parent=55 // pred_check_branch
        %2513 = sbr.rel (%p2511) target = $region60
      $region59: #{simclr_multi_forward.1} parent=55 // pred_region
        %s2514 = smul.u32 2, %s25
        %p2515 = scmp.lt.s32.totalorder %s24, 1
        %s2516 = scalar_select %p2515, %s24, 1
        %p2517 = scmp.lt.s32.totalorder %s2514, 1
        %s2518 = scalar_select %p2517, %s2514, 1
        %s2519 = smul.addr %s2516, 2
        %s2520 = sadd.s32 %s2518, %s2519
        %s2521 = smul.addr %s2520, 4
        %s2522 = scalar_lea.vmem %s7, %s2521
      $region60: #{simclr_multi_forward.1} parent=55 // pred_fallthru
        _
    $region56: #{simclr_multi_forward.1} parent=5 // pred_fallthru
      _
  $region6: #{simclr_multi_forward.1} parent=0 // loop_footer
    %s17 = sadd.s32 1, %s13
  $region7: #{simclr_multi_forward.1} parent=0 // loop_footer_branch
    %12 = sbr.rel target = $region3
  $region8: #{simclr_multi_forward.1} parent=0 // loop_exit
    _

</llo_original>
